<compile_context>
chip_gen: v7x
topology: tpu7x:2x2x1
jax: 0.10.0
libtpu: 0.0.40
codegen_flags: <defaults>
</compile_context>

<pallas_src>
import jax
import jax.numpy as jnp
from jax.experimental import pallas as pl
from jax.experimental.pallas import tpu as pltpu

IN_FEATURES = 784    # 28 * 28
OUT_FEATURES = 784   # 28 * 28
OUT_PADDED = 896     # next multiple of 128 -> lane-dense stores / DMA tiles
BATCH_TILE = 256     # batch tile for the gridded (large-B) path


def linear_relu_kernel(x_ref, w_ref, b_ref, o_ref):
    # x_ref: (tb, 784) bf16   w_ref: (784, 896) bf16
    # b_ref: (1, 896)  f32    o_ref: (tb, 896)  f32
    y = jnp.dot(x_ref[...], w_ref[...], preferred_element_type=jnp.float32)
    y = y + b_ref[...]                       # f32 bias add (broadcast over batch)
    o_ref[...] = jnp.maximum(y, 0.0).astype(o_ref.dtype)


def prepare_params(weight_f32, bias_f32):
    """Pad out dim 784 -> 896 (zeros) and cast the weight to bf16 once."""
    w = jnp.zeros((IN_FEATURES, OUT_PADDED), jnp.bfloat16)
    w = w.at[:, :OUT_FEATURES].set(weight_f32.astype(jnp.bfloat16))
    b = jnp.zeros((1, OUT_PADDED), jnp.float32)
    b = b.at[0, :OUT_FEATURES].set(bias_f32)
    return w, b


def _forward_single_block(x_bf16, w_pad, b_pad):
    """Small batch: whole problem in VMEM, no grid, no double-buffering."""
    B = x_bf16.shape[0]
    return pl.pallas_call(
        linear_relu_kernel,
        out_shape=jax.ShapeDtypeStruct((B, OUT_PADDED), jnp.float32),
        in_specs=[
            pl.BlockSpec(memory_space=pltpu.MemorySpace.VMEM),
            pl.BlockSpec(memory_space=pltpu.MemorySpace.VMEM),
            pl.BlockSpec(memory_space=pltpu.MemorySpace.VMEM),
        ],
        out_specs=pl.BlockSpec(memory_space=pltpu.MemorySpace.VMEM),
    )(x_bf16, w_pad, b_pad)


def _forward_batch_tiled(x_bf16, w_pad, b_pad):
    """Large batch: tile the batch axis; weight block index is constant so it
    is DMA'd once, while x/out tiles stream through a pipelined parallel axis."""
    B = x_bf16.shape[0]
    n_tiles = pl.cdiv(B, BATCH_TILE)
    b_rows = n_tiles * BATCH_TILE
    if b_rows != B:
        x_bf16 = jnp.pad(x_bf16, ((0, b_rows - B), (0, 0)))
    out = pl.pallas_call(
        linear_relu_kernel,
        out_shape=jax.ShapeDtypeStruct((b_rows, OUT_PADDED), jnp.float32),
        grid=(n_tiles,),
        in_specs=[
            pl.BlockSpec((BATCH_TILE, IN_FEATURES), lambda i: (i, 0)),
            pl.BlockSpec((IN_FEATURES, OUT_PADDED), lambda i: (0, 0)),
            pl.BlockSpec((1, OUT_PADDED), lambda i: (0, 0)),
        ],
        out_specs=pl.BlockSpec((BATCH_TILE, OUT_PADDED), lambda i: (i, 0)),
        compiler_params=pltpu.CompilerParams(
            dimension_semantics=("parallel",),
        ),
    )(x_bf16, w_pad, b_pad)
    return out[:B]


def model_forward(x, w_pad, b_pad):
    """x: (B, 1, 28, 28) f32; w_pad: (784, 896) bf16; b_pad: (1, 896) f32."""
    B = x.shape[0]
    x_flat = x.reshape(B, IN_FEATURES).astype(jnp.bfloat16)
    if B <= BATCH_TILE:
        out_pad = _forward_single_block(x_flat, w_pad, b_pad)
    else:
        out_pad = _forward_batch_tiled(x_flat, w_pad, b_pad)
    return out_pad[:, :OUT_FEATURES].reshape(B, 1, 28, 28)


def init_params(key):
    """Deterministic init matching nn.Linear's default uniform bounds (f32 master)."""
    kw, kb = jax.random.split(key)
    bound = 1.0 / jnp.sqrt(jnp.float32(IN_FEATURES))
    # stored as (in, out) so the kernel does x @ W directly
    weight = jax.random.uniform(
        kw, (IN_FEATURES, OUT_FEATURES), jnp.float32, -bound, bound
    )
    bias = jax.random.uniform(kb, (OUT_FEATURES,), jnp.float32, -bound, bound)
    return weight, bias


if __name__ == "__main__":
    key = jax.random.PRNGKey(0)
    k_x, k_p, k_x2 = jax.random.split(key, 3)

    weight, bias = init_params(k_p)          # f32 reference params
    w_pad, b_pad = prepare_params(weight, bias)

    def reference(xx):
        Bq = xx.shape[0]
        y = jnp.dot(xx.reshape(Bq, -1), weight,
                    precision=jax.lax.Precision.HIGHEST) + bias
        return jnp.maximum(y, 0.0).reshape(Bq, 1, 28, 28)

    # Small batch -> single-block (no-grid) path.
    B = 2
    x = jax.random.normal(k_x, (B, 1, 28, 28), jnp.float32)
    out = jax.block_until_ready(model_forward(x, w_pad, b_pad))
    assert out.shape == (B, 1, 28, 28)
    assert jnp.allclose(out, reference(x), atol=3e-2, rtol=3e-2)

    # Larger batch -> batch-tiled path (grid over batch, "parallel" axis).
    B2 = 384
    x2 = jax.random.normal(k_x2, (B2, 1, 28, 28), jnp.float32)
    out2 = jax.block_until_ready(model_forward(x2, w_pad, b_pad))
    assert out2.shape == (B2, 1, 28, 28)
    assert jnp.allclose(out2, reference(x2), atol=3e-2, rtol=3e-2)

    print("KERNEL_OK")
</pallas_src>

<mosaic_0001>
module attributes {stable_mosaic.version = 11 : i64} {
  func.func @linear_relu_kernel(%arg0: memref<2x784xbf16, #tpu.memory_space<vmem>>, %arg1: memref<784x896xbf16, #tpu.memory_space<vmem>>, %arg2: memref<1x896xf32, #tpu.memory_space<vmem>>, %arg3: memref<2x896xf32, #tpu.memory_space<vmem>>) attributes {dimension_semantics = [], scalar_prefetch = 0 : i64, scratch_operands = 0 : i64, tpu.core_type = #tpu.core_type<tc>} {
    %c0 = arith.constant 0 : index
    %c0_0 = arith.constant 0 : index
    %0 = vector.load %arg0[%c0, %c0_0] : memref<2x784xbf16, #tpu.memory_space<vmem>>, vector<2x784xbf16>
    %c0_1 = arith.constant 0 : index
    %c0_2 = arith.constant 0 : index
    %1 = vector.load %arg1[%c0_1, %c0_2] : memref<784x896xbf16, #tpu.memory_space<vmem>>, vector<784x896xbf16>
    %cst = arith.constant dense<0.000000e+00> : vector<2x896xf32>
    %2 = tpu.matmul %0, %1, %cst {dimension_numbers = #tpu.dot_dimension_numbers<[1], [0], [0], [1], [0, 0, 1, 1], [], []>} : vector<2x784xbf16>, vector<784x896xbf16>, vector<2x896xf32> -> vector<2x896xf32>
    %c0_3 = arith.constant 0 : index
    %c0_4 = arith.constant 0 : index
    %3 = vector.load %arg2[%c0_3, %c0_4] : memref<1x896xf32, #tpu.memory_space<vmem>>, vector<1x896xf32>
    %4 = vector.broadcast %3 : vector<1x896xf32> to vector<2x896xf32>
    %5 = arith.addf %2, %4 : vector<2x896xf32>
    %cst_5 = arith.constant 0.000000e+00 : f32
    %6 = vector.broadcast %cst_5 : f32 to vector<2x896xf32>
    %7 = arith.maximumf %5, %6 : vector<2x896xf32>
    %c0_6 = arith.constant 0 : index
    %c0_7 = arith.constant 0 : index
    %8 = vector.load %arg3[%c0_6, %c0_7] : memref<2x896xf32, #tpu.memory_space<vmem>>, vector<2x896xf32>
    tpu.vector_store %arg3[%c0_6, %c0_7], %7 {strides = array<i32>} : memref<2x896xf32, #tpu.memory_space<vmem>>, vector<2x896xf32>,
    return
  }
}

</mosaic_0001>

<llo_original>
// kernel: tpu_custom_call.1
$region0: #{tpu_custom_call.1}
  #allocation0 [shape = 'u32[]', space=smem, size = 0x4, offset = 0x4, fixed_abs, tag = 'smem constant byte address 0x4 - core index']
  #allocation1 [shape = 'u32[144,128]{1,0:T(1,128)}', space=vmem, size = 0x12000, scoped, tag = 'internal scratch']
  %s0 = inlined_call_operand.hbm [shape: bf16[2,784], index: 0, kind: input, shape index: {}]
  %s1 = inlined_call_operand.hbm [shape: bf16[784,896], index: 1, kind: input, shape index: {}]
  %s2 = inlined_call_operand.hbm [shape: f32[1,896], index: 2, kind: input, shape index: {}]
  %s3 = inlined_call_operand.hbm [shape: f32[2,896], index: 3, kind: output, shape index: {}]
  %s4 = sld [smem:[#allocation0]]
  $region34: #{tpu_custom_call.1} parent=0
    _
  %s6 = ssub.s32 1, %s4
  %s7 = scalar_select 0, %s6, %s4
  $region1: #{tpu_custom_call.1} parent=0
    #allocation2 [shape = 'u8[3584]{0}', space=vmem, size = 0x1000, scoped, tag = 'input window, operand 0, single buffered']
    #allocation3 [shape = 's32[1]{0}', space=sflag, size = 0x4, scoped, tag = 'scoped memory for tpu_custom_call.1']
    #allocation4 [shape = 's32[1]{0}', space=sflag, size = 0x4, scoped, tag = 'scoped memory for tpu_custom_call.1']
    #allocation5 [shape = 'u8[1404928]{0}', space=vmem, size = 0x157000, scoped, tag = 'input window, operand 1, single buffered']
    #allocation6 [shape = 's32[1]{0}', space=sflag, size = 0x4, scoped, tag = 'scoped memory for tpu_custom_call.1']
    #allocation7 [shape = 'u8[3584]{0}', space=vmem, size = 0x1000, scoped, tag = 'input window, operand 2, single buffered']
    #allocation8 [shape = 'u8[7168]{0}', space=vmem, size = 0x1c00, scoped, tag = 'output window, operand 0, single buffered']
    %8 = vsyncpa [#allocation3], 0
    %9 = vsyncpa [#allocation6], 0
    %10 = vsyncpa [#allocation4], 0
    // Predicated region
    $region2: #{tpu_custom_call.1} parent=1 // pred_check
      _
    $region3: #{tpu_custom_call.1} parent=1 // pred_check_branch
      %12 = sbr.rel (0) target = $region5
    $region4: #{tpu_custom_call.1} parent=1 // pred_region
      %s14 = ssub.s32 112, 112
      %15 = vsyncadd [#allocation3], %s14
      %s17 = sshll.u32 [#allocation2], 4
      %s18 = int_to_ptr.vmem [resolvable:$true] %s17
      %20 = dma.hbm_to_vmem [thread:$0]  %s0, 112, %s18, [#allocation3]
    $region5: #{tpu_custom_call.1} parent=1 // pred_fallthru
      _
    // Predicated region
    $region6: #{tpu_custom_call.1} parent=1 // pred_check
      _
    $region7: #{tpu_custom_call.1} parent=1 // pred_check_branch
      %22 = sbr.rel (0) target = $region9
    $region8: #{tpu_custom_call.1} parent=1 // pred_region
      %s24 = ssub.s32 43904, 43904
      %25 = vsyncadd [#allocation6], %s24
      %s26 = sshll.u32 [#allocation5], 4
      %s27 = int_to_ptr.vmem [resolvable:$true] %s26
      %32 = dma.hbm_to_vmem [thread:$0]  %s1, 43904, %s27, [#allocation6], 448, 448, 28
    $region9: #{tpu_custom_call.1} parent=1 // pred_fallthru
      _
    // Predicated region
    $region10: #{tpu_custom_call.1} parent=1 // pred_check
      _
    $region11: #{tpu_custom_call.1} parent=1 // pred_check_branch
      %34 = sbr.rel (0) target = $region13
    $region12: #{tpu_custom_call.1} parent=1 // pred_region
      %s36 = ssub.s32 112, 112
      %37 = vsyncadd [#allocation6], %s36
      %s39 = sshll.u32 [#allocation7], 4
      %s40 = int_to_ptr.vmem [resolvable:$true] %s39
      %42 = dma.hbm_to_vmem [thread:$0]  %s2, 112, %s40, [#allocation6]
    $region13: #{tpu_custom_call.1} parent=1 // pred_fallthru
      _
    // Predicated region
    $region14: #{tpu_custom_call.1} parent=1 // pred_check
      _
    $region15: #{tpu_custom_call.1} parent=1 // pred_check_branch
      %44 = sbr.rel (0) target = $region17
    $region16: #{tpu_custom_call.1} parent=1 // pred_region
      %45 = dma.done [#allocation3], 112
    $region17: #{tpu_custom_call.1} parent=1 // pred_fallthru
      _
    // Predicated region
    $region18: #{tpu_custom_call.1} parent=1 // pred_check
      _
    $region19: #{tpu_custom_call.1} parent=1 // pred_check_branch
      %47 = sbr.rel (0) target = $region21
    $region20: #{tpu_custom_call.1} parent=1 // pred_region
      %48 = dma.done [#allocation6], 43904
    $region21: #{tpu_custom_call.1} parent=1 // pred_fallthru
      _
    // Predicated region
    $region22: #{tpu_custom_call.1} parent=1 // pred_check
      _
    $region23: #{tpu_custom_call.1} parent=1 // pred_check_branch
      %50 = sbr.rel (0) target = $region25
    $region24: #{tpu_custom_call.1} parent=1 // pred_region
      %51 = dma.done [#allocation6], 112
    $region25: #{tpu_custom_call.1} parent=1 // pred_fallthru
      _
    %v53 = vld [vmem:[#allocation2] sm:$0x7f]
    %v54 = vld [vmem:[#allocation5] sm:$0xff]
    %v55 = vld [vmem:[#allocation5 + $0x8] sm:$0xff]
    %v56 = vld [vmem:[#allocation5 + $0x10] sm:$0xff]
    %v57 = vld [vmem:[#allocation5 + $0x18] sm:$0xf]
    %v58 = vld [vmem:[#allocation5 + $0x1c] sm:$0xff]
    %v59 = vld [vmem:[#allocation5 + $0x24] sm:$0xff]
    %v60 = vld [vmem:[#allocation5 + $0x2c] sm:$0xff]
    %v61 = vld [vmem:[#allocation5 + $0x34] sm:$0xf]
    %v62 = vld [vmem:[#allocation5 + $0x38] sm:$0xff]
    %v63 = vld [vmem:[#allocation5 + $0x40] sm:$0xff]
    %v64 = vld [vmem:[#allocation5 + $0x48] sm:$0xff]
    %v65 = vld [vmem:[#allocation5 + $0x50] sm:$0xf]
    %v66 = vld [vmem:[#allocation5 + $0x54] sm:$0xff]
    %v67 = vld [vmem:[#allocation5 + $0x5c] sm:$0xff]
    %v68 = vld [vmem:[#allocation5 + $0x64] sm:$0xff]
    %v69 = vld [vmem:[#allocation5 + $0x6c] sm:$0xf]
    %v70 = vld [vmem:[#allocation5 + $0x70] sm:$0xff]
    %v71 = vld [vmem:[#allocation5 + $0x78] sm:$0xff]
    %v72 = vld [vmem:[#allocation5 + $0x80] sm:$0xff]
    %v73 = vld [vmem:[#allocation5 + $0x88] sm:$0xf]
    %v74 = vld [vmem:[#allocation5 + $0x8c] sm:$0xff]
    %v75 = vld [vmem:[#allocation5 + $0x94] sm:$0xff]
    %v76 = vld [vmem:[#allocation5 + $0x9c] sm:$0xff]
    %v77 = vld [vmem:[#allocation5 + $0xa4] sm:$0xf]
    %v78 = vld [vmem:[#allocation5 + $0xa8] sm:$0xff]
    %v79 = vld [vmem:[#allocation5 + $0xb0] sm:$0xff]
    %v80 = vld [vmem:[#allocation5 + $0xb8] sm:$0xff]
    %v81 = vld [vmem:[#allocation5 + $0xc0] sm:$0xf]
    %v82 = vld [vmem:[#allocation5 + $0xc4] sm:$0xff]
    %v83 = vld [vmem:[#allocation5 + $0xcc] sm:$0xff]
    %v84 = vld [vmem:[#allocation5 + $0xd4] sm:$0xff]
    %v85 = vld [vmem:[#allocation5 + $0xdc] sm:$0xf]
    %v86 = vld [vmem:[#allocation5 + $0xe0] sm:$0xff]
    %v87 = vld [vmem:[#allocation5 + $0xe8] sm:$0xff]
    %v88 = vld [vmem:[#allocation5 + $0xf0] sm:$0xff]
    %v89 = vld [vmem:[#allocation5 + $0xf8] sm:$0xf]
    %v90 = vld [vmem:[#allocation5 + $0xfc] sm:$0xff]
    %v91 = vld [vmem:[#allocation5 + $0x104] sm:$0xff]
    %v92 = vld [vmem:[#allocation5 + $0x10c] sm:$0xff]
    %v93 = vld [vmem:[#allocation5 + $0x114] sm:$0xf]
    %v94 = vld [vmem:[#allocation5 + $0x118] sm:$0xff]
    %v95 = vld [vmem:[#allocation5 + $0x120] sm:$0xff]
    %v96 = vld [vmem:[#allocation5 + $0x128] sm:$0xff]
    %v97 = vld [vmem:[#allocation5 + $0x130] sm:$0xf]
    %v98 = vld [vmem:[#allocation5 + $0x134] sm:$0xff]
    %v99 = vld [vmem:[#allocation5 + $0x13c] sm:$0xff]
    %v100 = vld [vmem:[#allocation5 + $0x144] sm:$0xff]
    %v101 = vld [vmem:[#allocation5 + $0x14c] sm:$0xf]
    %v102 = vld [vmem:[#allocation5 + $0x150] sm:$0xff]
    %v103 = vld [vmem:[#allocation5 + $0x158] sm:$0xff]
    %v104 = vld [vmem:[#allocation5 + $0x160] sm:$0xff]
    %v105 = vld [vmem:[#allocation5 + $0x168] sm:$0xf]
    %v106 = vld [vmem:[#allocation5 + $0x16c] sm:$0xff]
    %v107 = vld [vmem:[#allocation5 + $0x174] sm:$0xff]
    %v108 = vld [vmem:[#allocation5 + $0x17c] sm:$0xff]
    %v109 = vld [vmem:[#allocation5 + $0x184] sm:$0xf]
    %v110 = vld [vmem:[#allocation5 + $0x188] sm:$0xff]
    %v111 = vld [vmem:[#allocation5 + $0x190] sm:$0xff]
    %v112 = vld [vmem:[#allocation5 + $0x198] sm:$0xff]
    %v113 = vld [vmem:[#allocation5 + $0x1a0] sm:$0xf]
    %v114 = vld [vmem:[#allocation5 + $0x1a4] sm:$0xff]
    %v115 = vld [vmem:[#allocation5 + $0x1ac] sm:$0xff]
    %v116 = vld [vmem:[#allocation5 + $0x1b4] sm:$0xff]
    %v117 = vld [vmem:[#allocation5 + $0x1bc] sm:$0xf]
    %v118 = vld [vmem:[#allocation5 + $0x1c0] sm:$0xff]
    %v119 = vld [vmem:[#allocation5 + $0x1c8] sm:$0xff]
    %v120 = vld [vmem:[#allocation5 + $0x1d0] sm:$0xff]
    %v121 = vld [vmem:[#allocation5 + $0x1d8] sm:$0xf]
    %v122 = vld [vmem:[#allocation5 + $0x1dc] sm:$0xff]
    %v123 = vld [vmem:[#allocation5 + $0x1e4] sm:$0xff]
    %v124 = vld [vmem:[#allocation5 + $0x1ec] sm:$0xff]
    %v125 = vld [vmem:[#allocation5 + $0x1f4] sm:$0xf]
    %v126 = vld [vmem:[#allocation5 + $0x1f8] sm:$0xff]
    %v127 = vld [vmem:[#allocation5 + $0x200] sm:$0xff]
    %v128 = vld [vmem:[#allocation5 + $0x208] sm:$0xff]
    %v129 = vld [vmem:[#allocation5 + $0x210] sm:$0xf]
    %v130 = vld [vmem:[#allocation5 + $0x214] sm:$0xff]
    %v131 = vld [vmem:[#allocation5 + $0x21c] sm:$0xff]
    %v132 = vld [vmem:[#allocation5 + $0x224] sm:$0xff]
    %v133 = vld [vmem:[#allocation5 + $0x22c] sm:$0xf]
    %v134 = vld [vmem:[#allocation5 + $0x230] sm:$0xff]
    %v135 = vld [vmem:[#allocation5 + $0x238] sm:$0xff]
    %v136 = vld [vmem:[#allocation5 + $0x240] sm:$0xff]
    %v137 = vld [vmem:[#allocation5 + $0x248] sm:$0xf]
    %v138 = vld [vmem:[#allocation5 + $0x24c] sm:$0xff]
    %v139 = vld [vmem:[#allocation5 + $0x254] sm:$0xff]
    %v140 = vld [vmem:[#allocation5 + $0x25c] sm:$0xff]
    %v141 = vld [vmem:[#allocation5 + $0x264] sm:$0xf]
    %v142 = vld [vmem:[#allocation5 + $0x268] sm:$0xff]
    %v143 = vld [vmem:[#allocation5 + $0x270] sm:$0xff]
    %v144 = vld [vmem:[#allocation5 + $0x278] sm:$0xff]
    %v145 = vld [vmem:[#allocation5 + $0x280] sm:$0xf]
    %v146 = vld [vmem:[#allocation5 + $0x284] sm:$0xff]
    %v147 = vld [vmem:[#allocation5 + $0x28c] sm:$0xff]
    %v148 = vld [vmem:[#allocation5 + $0x294] sm:$0xff]
    %v149 = vld [vmem:[#allocation5 + $0x29c] sm:$0xf]
    %v150 = vld [vmem:[#allocation5 + $0x2a0] sm:$0xff]
    %v151 = vld [vmem:[#allocation5 + $0x2a8] sm:$0xff]
    %v152 = vld [vmem:[#allocation5 + $0x2b0] sm:$0xff]
    %v153 = vld [vmem:[#allocation5 + $0x2b8] sm:$0xf]
    %v154 = vld [vmem:[#allocation5 + $0x2bc] sm:$0xff]
    %v155 = vld [vmem:[#allocation5 + $0x2c4] sm:$0xff]
    %v156 = vld [vmem:[#allocation5 + $0x2cc] sm:$0xff]
    %v157 = vld [vmem:[#allocation5 + $0x2d4] sm:$0xf]
    %v158 = vld [vmem:[#allocation5 + $0x2d8] sm:$0xff]
    %v159 = vld [vmem:[#allocation5 + $0x2e0] sm:$0xff]
    %v160 = vld [vmem:[#allocation5 + $0x2e8] sm:$0xff]
    %v161 = vld [vmem:[#allocation5 + $0x2f0] sm:$0xf]
    %v162 = vld [vmem:[#allocation5 + $0x2f4] sm:$0xff]
    %v163 = vld [vmem:[#allocation5 + $0x2fc] sm:$0xff]
    %v164 = vld [vmem:[#allocation5 + $0x304] sm:$0xff]
    %v165 = vld [vmem:[#allocation5 + $0x30c] sm:$0xf]
    %v166 = vld [vmem:[#allocation5 + $0x310] sm:$0xff]
    %v167 = vld [vmem:[#allocation5 + $0x318] sm:$0xff]
    %v168 = vld [vmem:[#allocation5 + $0x320] sm:$0xff]
    %v169 = vld [vmem:[#allocation5 + $0x328] sm:$0xf]
    %v170 = vld [vmem:[#allocation5 + $0x32c] sm:$0xff]
    %v171 = vld [vmem:[#allocation5 + $0x334] sm:$0xff]
    %v172 = vld [vmem:[#allocation5 + $0x33c] sm:$0xff]
    %v173 = vld [vmem:[#allocation5 + $0x344] sm:$0xf]
    %v174 = vld [vmem:[#allocation5 + $0x348] sm:$0xff]
    %v175 = vld [vmem:[#allocation5 + $0x350] sm:$0xff]
    %v176 = vld [vmem:[#allocation5 + $0x358] sm:$0xff]
    %v177 = vld [vmem:[#allocation5 + $0x360] sm:$0xf]
    %v178 = vld [vmem:[#allocation5 + $0x364] sm:$0xff]
    %v179 = vld [vmem:[#allocation5 + $0x36c] sm:$0xff]
    %v180 = vld [vmem:[#allocation5 + $0x374] sm:$0xff]
    %v181 = vld [vmem:[#allocation5 + $0x37c] sm:$0xf]
    %v182 = vld [vmem:[#allocation5 + $0x380] sm:$0xff]
    %v183 = vld [vmem:[#allocation5 + $0x388] sm:$0xff]
    %v184 = vld [vmem:[#allocation5 + $0x390] sm:$0xff]
    %v185 = vld [vmem:[#allocation5 + $0x398] sm:$0xf]
    %v186 = vld [vmem:[#allocation5 + $0x39c] sm:$0xff]
    %v187 = vld [vmem:[#allocation5 + $0x3a4] sm:$0xff]
    %v188 = vld [vmem:[#allocation5 + $0x3ac] sm:$0xff]
    %v189 = vld [vmem:[#allocation5 + $0x3b4] sm:$0xf]
    %v190 = vld [vmem:[#allocation5 + $0x3b8] sm:$0xff]
    %v191 = vld [vmem:[#allocation5 + $0x3c0] sm:$0xff]
    %v192 = vld [vmem:[#allocation5 + $0x3c8] sm:$0xff]
    %v193 = vld [vmem:[#allocation5 + $0x3d0] sm:$0xf]
    %v194 = vld [vmem:[#allocation5 + $0x3d4] sm:$0xff]
    %v195 = vld [vmem:[#allocation5 + $0x3dc] sm:$0xff]
    %v196 = vld [vmem:[#allocation5 + $0x3e4] sm:$0xff]
    %v197 = vld [vmem:[#allocation5 + $0x3ec] sm:$0xf]
    %v198 = vld [vmem:[#allocation5 + $0x3f0] sm:$0xff]
    %v199 = vld [vmem:[#allocation5 + $0x3f8] sm:$0xff]
    %v200 = vld [vmem:[#allocation5 + $0x400] sm:$0xff]
    %v201 = vld [vmem:[#allocation5 + $0x408] sm:$0xf]
    %v202 = vld [vmem:[#allocation5 + $0x40c] sm:$0xff]
    %v203 = vld [vmem:[#allocation5 + $0x414] sm:$0xff]
    %v204 = vld [vmem:[#allocation5 + $0x41c] sm:$0xff]
    %v205 = vld [vmem:[#allocation5 + $0x424] sm:$0xf]
    %v206 = vld [vmem:[#allocation5 + $0x428] sm:$0xff]
    %v207 = vld [vmem:[#allocation5 + $0x430] sm:$0xff]
    %v208 = vld [vmem:[#allocation5 + $0x438] sm:$0xff]
    %v209 = vld [vmem:[#allocation5 + $0x440] sm:$0xf]
    %v210 = vld [vmem:[#allocation5 + $0x444] sm:$0xff]
    %v211 = vld [vmem:[#allocation5 + $0x44c] sm:$0xff]
    %v212 = vld [vmem:[#allocation5 + $0x454] sm:$0xff]
    %v213 = vld [vmem:[#allocation5 + $0x45c] sm:$0xf]
    %v214 = vld [vmem:[#allocation5 + $0x460] sm:$0xff]
    %v215 = vld [vmem:[#allocation5 + $0x468] sm:$0xff]
    %v216 = vld [vmem:[#allocation5 + $0x470] sm:$0xff]
    %v217 = vld [vmem:[#allocation5 + $0x478] sm:$0xf]
    %v218 = vld [vmem:[#allocation5 + $0x47c] sm:$0xff]
    %v219 = vld [vmem:[#allocation5 + $0x484] sm:$0xff]
    %v220 = vld [vmem:[#allocation5 + $0x48c] sm:$0xff]
    %v221 = vld [vmem:[#allocation5 + $0x494] sm:$0xf]
    %v222 = vld [vmem:[#allocation5 + $0x498] sm:$0xff]
    %v223 = vld [vmem:[#allocation5 + $0x4a0] sm:$0xff]
    %v224 = vld [vmem:[#allocation5 + $0x4a8] sm:$0xff]
    %v225 = vld [vmem:[#allocation5 + $0x4b0] sm:$0xf]
    %v226 = vld [vmem:[#allocation5 + $0x4b4] sm:$0xff]
    %v227 = vld [vmem:[#allocation5 + $0x4bc] sm:$0xff]
    %v228 = vld [vmem:[#allocation5 + $0x4c4] sm:$0xff]
    %v229 = vld [vmem:[#allocation5 + $0x4cc] sm:$0xf]
    %v230 = vld [vmem:[#allocation5 + $0x4d0] sm:$0xff]
    %v231 = vld [vmem:[#allocation5 + $0x4d8] sm:$0xff]
    %v232 = vld [vmem:[#allocation5 + $0x4e0] sm:$0xff]
    %v233 = vld [vmem:[#allocation5 + $0x4e8] sm:$0xf]
    %v234 = vld [vmem:[#allocation5 + $0x4ec] sm:$0xff]
    %v235 = vld [vmem:[#allocation5 + $0x4f4] sm:$0xff]
    %v236 = vld [vmem:[#allocation5 + $0x4fc] sm:$0xff]
    %v237 = vld [vmem:[#allocation5 + $0x504] sm:$0xf]
    %v238 = vld [vmem:[#allocation5 + $0x508] sm:$0xff]
    %v239 = vld [vmem:[#allocation5 + $0x510] sm:$0xff]
    %v240 = vld [vmem:[#allocation5 + $0x518] sm:$0xff]
    %v241 = vld [vmem:[#allocation5 + $0x520] sm:$0xf]
    %v242 = vld [vmem:[#allocation5 + $0x524] sm:$0xff]
    %v243 = vld [vmem:[#allocation5 + $0x52c] sm:$0xff]
    %v244 = vld [vmem:[#allocation5 + $0x534] sm:$0xff]
    %v245 = vld [vmem:[#allocation5 + $0x53c] sm:$0xf]
    %v246 = vld [vmem:[#allocation5 + $0x540] sm:$0xff]
    %v247 = vld [vmem:[#allocation5 + $0x548] sm:$0xff]
    %v248 = vld [vmem:[#allocation5 + $0x550] sm:$0xff]
    %v249 = vld [vmem:[#allocation5 + $0x558] sm:$0xf]
    %v250 = vld [vmem:[#allocation5 + $0x55c] sm:$0xff]
    %v251 = vld [vmem:[#allocation5 + $0x564] sm:$0xff]
    %v252 = vld [vmem:[#allocation5 + $0x56c] sm:$0xff]
    %v253 = vld [vmem:[#allocation5 + $0x574] sm:$0xf]
    %v254 = vld [vmem:[#allocation5 + $0x578] sm:$0xff]
    %v255 = vld [vmem:[#allocation5 + $0x580] sm:$0xff]
    %v256 = vld [vmem:[#allocation5 + $0x588] sm:$0xff]
    %v257 = vld [vmem:[#allocation5 + $0x590] sm:$0xf]
    %v258 = vld [vmem:[#allocation5 + $0x594] sm:$0xff]
    %v259 = vld [vmem:[#allocation5 + $0x59c] sm:$0xff]
    %v260 = vld [vmem:[#allocation5 + $0x5a4] sm:$0xff]
    %v261 = vld [vmem:[#allocation5 + $0x5ac] sm:$0xf]
    %v262 = vld [vmem:[#allocation5 + $0x5b0] sm:$0xff]
    %v263 = vld [vmem:[#allocation5 + $0x5b8] sm:$0xff]
    %v264 = vld [vmem:[#allocation5 + $0x5c0] sm:$0xff]
    %v265 = vld [vmem:[#allocation5 + $0x5c8] sm:$0xf]
    %v266 = vld [vmem:[#allocation5 + $0x5cc] sm:$0xff]
    %v267 = vld [vmem:[#allocation5 + $0x5d4] sm:$0xff]
    %v268 = vld [vmem:[#allocation5 + $0x5dc] sm:$0xff]
    %v269 = vld [vmem:[#allocation5 + $0x5e4] sm:$0xf]
    %v270 = vld [vmem:[#allocation5 + $0x5e8] sm:$0xff]
    %v271 = vld [vmem:[#allocation5 + $0x5f0] sm:$0xff]
    %v272 = vld [vmem:[#allocation5 + $0x5f8] sm:$0xff]
    %v273 = vld [vmem:[#allocation5 + $0x600] sm:$0xf]
    %v274 = vld [vmem:[#allocation5 + $0x604] sm:$0xff]
    %v275 = vld [vmem:[#allocation5 + $0x60c] sm:$0xff]
    %v276 = vld [vmem:[#allocation5 + $0x614] sm:$0xff]
    %v277 = vld [vmem:[#allocation5 + $0x61c] sm:$0xf]
    %v278 = vld [vmem:[#allocation5 + $0x620] sm:$0xff]
    %v279 = vld [vmem:[#allocation5 + $0x628] sm:$0xff]
    %v280 = vld [vmem:[#allocation5 + $0x630] sm:$0xff]
    %v281 = vld [vmem:[#allocation5 + $0x638] sm:$0xf]
    %v282 = vld [vmem:[#allocation5 + $0x63c] sm:$0xff]
    %v283 = vld [vmem:[#allocation5 + $0x644] sm:$0xff]
    %v284 = vld [vmem:[#allocation5 + $0x64c] sm:$0xff]
    %v285 = vld [vmem:[#allocation5 + $0x654] sm:$0xf]
    %v286 = vld [vmem:[#allocation5 + $0x658] sm:$0xff]
    %v287 = vld [vmem:[#allocation5 + $0x660] sm:$0xff]
    %v288 = vld [vmem:[#allocation5 + $0x668] sm:$0xff]
    %v289 = vld [vmem:[#allocation5 + $0x670] sm:$0xf]
    %v290 = vld [vmem:[#allocation5 + $0x674] sm:$0xff]
    %v291 = vld [vmem:[#allocation5 + $0x67c] sm:$0xff]
    %v292 = vld [vmem:[#allocation5 + $0x684] sm:$0xff]
    %v293 = vld [vmem:[#allocation5 + $0x68c] sm:$0xf]
    %v294 = vld [vmem:[#allocation5 + $0x690] sm:$0xff]
    %v295 = vld [vmem:[#allocation5 + $0x698] sm:$0xff]
    %v296 = vld [vmem:[#allocation5 + $0x6a0] sm:$0xff]
    %v297 = vld [vmem:[#allocation5 + $0x6a8] sm:$0xf]
    %v298 = vld [vmem:[#allocation5 + $0x6ac] sm:$0xff]
    %v299 = vld [vmem:[#allocation5 + $0x6b4] sm:$0xff]
    %v300 = vld [vmem:[#allocation5 + $0x6bc] sm:$0xff]
    %v301 = vld [vmem:[#allocation5 + $0x6c4] sm:$0xf]
    %v302 = vld [vmem:[#allocation5 + $0x6c8] sm:$0xff]
    %v303 = vld [vmem:[#allocation5 + $0x6d0] sm:$0xff]
    %v304 = vld [vmem:[#allocation5 + $0x6d8] sm:$0xff]
    %v305 = vld [vmem:[#allocation5 + $0x6e0] sm:$0xf]
    %v306 = vld [vmem:[#allocation5 + $0x6e4] sm:$0xff]
    %v307 = vld [vmem:[#allocation5 + $0x6ec] sm:$0xff]
    %v308 = vld [vmem:[#allocation5 + $0x6f4] sm:$0xff]
    %v309 = vld [vmem:[#allocation5 + $0x6fc] sm:$0xf]
    %v310 = vld [vmem:[#allocation5 + $0x700] sm:$0xff]
    %v311 = vld [vmem:[#allocation5 + $0x708] sm:$0xff]
    %v312 = vld [vmem:[#allocation5 + $0x710] sm:$0xff]
    %v313 = vld [vmem:[#allocation5 + $0x718] sm:$0xf]
    %v314 = vld [vmem:[#allocation5 + $0x71c] sm:$0xff]
    %v315 = vld [vmem:[#allocation5 + $0x724] sm:$0xff]
    %v316 = vld [vmem:[#allocation5 + $0x72c] sm:$0xff]
    %v317 = vld [vmem:[#allocation5 + $0x734] sm:$0xf]
    %v318 = vld [vmem:[#allocation5 + $0x738] sm:$0xff]
    %v319 = vld [vmem:[#allocation5 + $0x740] sm:$0xff]
    %v320 = vld [vmem:[#allocation5 + $0x748] sm:$0xff]
    %v321 = vld [vmem:[#allocation5 + $0x750] sm:$0xf]
    %v322 = vld [vmem:[#allocation5 + $0x754] sm:$0xff]
    %v323 = vld [vmem:[#allocation5 + $0x75c] sm:$0xff]
    %v324 = vld [vmem:[#allocation5 + $0x764] sm:$0xff]
    %v325 = vld [vmem:[#allocation5 + $0x76c] sm:$0xf]
    %v326 = vld [vmem:[#allocation5 + $0x770] sm:$0xff]
    %v327 = vld [vmem:[#allocation5 + $0x778] sm:$0xff]
    %v328 = vld [vmem:[#allocation5 + $0x780] sm:$0xff]
    %v329 = vld [vmem:[#allocation5 + $0x788] sm:$0xf]
    %v330 = vld [vmem:[#allocation5 + $0x78c] sm:$0xff]
    %v331 = vld [vmem:[#allocation5 + $0x794] sm:$0xff]
    %v332 = vld [vmem:[#allocation5 + $0x79c] sm:$0xff]
    %v333 = vld [vmem:[#allocation5 + $0x7a4] sm:$0xf]
    %v334 = vld [vmem:[#allocation5 + $0x7a8] sm:$0xff]
    %v335 = vld [vmem:[#allocation5 + $0x7b0] sm:$0xff]
    %v336 = vld [vmem:[#allocation5 + $0x7b8] sm:$0xff]
    %v337 = vld [vmem:[#allocation5 + $0x7c0] sm:$0xf]
    %v338 = vld [vmem:[#allocation5 + $0x7c4] sm:$0xff]
    %v339 = vld [vmem:[#allocation5 + $0x7cc] sm:$0xff]
    %v340 = vld [vmem:[#allocation5 + $0x7d4] sm:$0xff]
    %v341 = vld [vmem:[#allocation5 + $0x7dc] sm:$0xf]
    %v342 = vld [vmem:[#allocation5 + $0x7e0] sm:$0xff]
    %v343 = vld [vmem:[#allocation5 + $0x7e8] sm:$0xff]
    %v344 = vld [vmem:[#allocation5 + $0x7f0] sm:$0xff]
    %v345 = vld [vmem:[#allocation5 + $0x7f8] sm:$0xf]
    %v346 = vld [vmem:[#allocation5 + $0x7fc] sm:$0xff]
    %v347 = vld [vmem:[#allocation5 + $0x804] sm:$0xff]
    %v348 = vld [vmem:[#allocation5 + $0x80c] sm:$0xff]
    %v349 = vld [vmem:[#allocation5 + $0x814] sm:$0xf]
    %v350 = vld [vmem:[#allocation5 + $0x818] sm:$0xff]
    %v351 = vld [vmem:[#allocation5 + $0x820] sm:$0xff]
    %v352 = vld [vmem:[#allocation5 + $0x828] sm:$0xff]
    %v353 = vld [vmem:[#allocation5 + $0x830] sm:$0xf]
    %v354 = vld [vmem:[#allocation5 + $0x834] sm:$0xff]
    %v355 = vld [vmem:[#allocation5 + $0x83c] sm:$0xff]
    %v356 = vld [vmem:[#allocation5 + $0x844] sm:$0xff]
    %v357 = vld [vmem:[#allocation5 + $0x84c] sm:$0xf]
    %v358 = vld [vmem:[#allocation5 + $0x850] sm:$0xff]
    %v359 = vld [vmem:[#allocation5 + $0x858] sm:$0xff]
    %v360 = vld [vmem:[#allocation5 + $0x860] sm:$0xff]
    %v361 = vld [vmem:[#allocation5 + $0x868] sm:$0xf]
    %v362 = vld [vmem:[#allocation5 + $0x86c] sm:$0xff]
    %v363 = vld [vmem:[#allocation5 + $0x874] sm:$0xff]
    %v364 = vld [vmem:[#allocation5 + $0x87c] sm:$0xff]
    %v365 = vld [vmem:[#allocation5 + $0x884] sm:$0xf]
    %v366 = vld [vmem:[#allocation5 + $0x888] sm:$0xff]
    %v367 = vld [vmem:[#allocation5 + $0x890] sm:$0xff]
    %v368 = vld [vmem:[#allocation5 + $0x898] sm:$0xff]
    %v369 = vld [vmem:[#allocation5 + $0x8a0] sm:$0xf]
    %v370 = vld [vmem:[#allocation5 + $0x8a4] sm:$0xff]
    %v371 = vld [vmem:[#allocation5 + $0x8ac] sm:$0xff]
    %v372 = vld [vmem:[#allocation5 + $0x8b4] sm:$0xff]
    %v373 = vld [vmem:[#allocation5 + $0x8bc] sm:$0xf]
    %v374 = vld [vmem:[#allocation5 + $0x8c0] sm:$0xff]
    %v375 = vld [vmem:[#allocation5 + $0x8c8] sm:$0xff]
    %v376 = vld [vmem:[#allocation5 + $0x8d0] sm:$0xff]
    %v377 = vld [vmem:[#allocation5 + $0x8d8] sm:$0xf]
    %v378 = vld [vmem:[#allocation5 + $0x8dc] sm:$0xff]
    %v379 = vld [vmem:[#allocation5 + $0x8e4] sm:$0xff]
    %v380 = vld [vmem:[#allocation5 + $0x8ec] sm:$0xff]
    %v381 = vld [vmem:[#allocation5 + $0x8f4] sm:$0xf]
    %v382 = vld [vmem:[#allocation5 + $0x8f8] sm:$0xff]
    %v383 = vld [vmem:[#allocation5 + $0x900] sm:$0xff]
    %v384 = vld [vmem:[#allocation5 + $0x908] sm:$0xff]
    %v385 = vld [vmem:[#allocation5 + $0x910] sm:$0xf]
    %v386 = vld [vmem:[#allocation5 + $0x914] sm:$0xff]
    %v387 = vld [vmem:[#allocation5 + $0x91c] sm:$0xff]
    %v388 = vld [vmem:[#allocation5 + $0x924] sm:$0xff]
    %v389 = vld [vmem:[#allocation5 + $0x92c] sm:$0xf]
    %v390 = vld [vmem:[#allocation5 + $0x930] sm:$0xff]
    %v391 = vld [vmem:[#allocation5 + $0x938] sm:$0xff]
    %v392 = vld [vmem:[#allocation5 + $0x940] sm:$0xff]
    %v393 = vld [vmem:[#allocation5 + $0x948] sm:$0xf]
    %v394 = vld [vmem:[#allocation5 + $0x94c] sm:$0xff]
    %v395 = vld [vmem:[#allocation5 + $0x954] sm:$0xff]
    %v396 = vld [vmem:[#allocation5 + $0x95c] sm:$0xff]
    %v397 = vld [vmem:[#allocation5 + $0x964] sm:$0xf]
    %v398 = vld [vmem:[#allocation5 + $0x968] sm:$0xff]
    %v399 = vld [vmem:[#allocation5 + $0x970] sm:$0xff]
    %v400 = vld [vmem:[#allocation5 + $0x978] sm:$0xff]
    %v401 = vld [vmem:[#allocation5 + $0x980] sm:$0xf]
    %v402 = vld [vmem:[#allocation5 + $0x984] sm:$0xff]
    %v403 = vld [vmem:[#allocation5 + $0x98c] sm:$0xff]
    %v404 = vld [vmem:[#allocation5 + $0x994] sm:$0xff]
    %v405 = vld [vmem:[#allocation5 + $0x99c] sm:$0xf]
    %v406 = vld [vmem:[#allocation5 + $0x9a0] sm:$0xff]
    %v407 = vld [vmem:[#allocation5 + $0x9a8] sm:$0xff]
    %v408 = vld [vmem:[#allocation5 + $0x9b0] sm:$0xff]
    %v409 = vld [vmem:[#allocation5 + $0x9b8] sm:$0xf]
    %v410 = vld [vmem:[#allocation5 + $0x9bc] sm:$0xff]
    %v411 = vld [vmem:[#allocation5 + $0x9c4] sm:$0xff]
    %v412 = vld [vmem:[#allocation5 + $0x9cc] sm:$0xff]
    %v413 = vld [vmem:[#allocation5 + $0x9d4] sm:$0xf]
    %v414 = vld [vmem:[#allocation5 + $0x9d8] sm:$0xff]
    %v415 = vld [vmem:[#allocation5 + $0x9e0] sm:$0xff]
    %v416 = vld [vmem:[#allocation5 + $0x9e8] sm:$0xff]
    %v417 = vld [vmem:[#allocation5 + $0x9f0] sm:$0xf]
    %v418 = vld [vmem:[#allocation5 + $0x9f4] sm:$0xff]
    %v419 = vld [vmem:[#allocation5 + $0x9fc] sm:$0xff]
    %v420 = vld [vmem:[#allocation5 + $0xa04] sm:$0xff]
    %v421 = vld [vmem:[#allocation5 + $0xa0c] sm:$0xf]
    %v422 = vld [vmem:[#allocation5 + $0xa10] sm:$0xff]
    %v423 = vld [vmem:[#allocation5 + $0xa18] sm:$0xff]
    %v424 = vld [vmem:[#allocation5 + $0xa20] sm:$0xff]
    %v425 = vld [vmem:[#allocation5 + $0xa28] sm:$0xf]
    %v426 = vld [vmem:[#allocation5 + $0xa2c] sm:$0xff]
    %v427 = vld [vmem:[#allocation5 + $0xa34] sm:$0xff]
    %v428 = vld [vmem:[#allocation5 + $0xa3c] sm:$0xff]
    %v429 = vld [vmem:[#allocation5 + $0xa44] sm:$0xf]
    %v430 = vld [vmem:[#allocation5 + $0xa48] sm:$0xff]
    %v431 = vld [vmem:[#allocation5 + $0xa50] sm:$0xff]
    %v432 = vld [vmem:[#allocation5 + $0xa58] sm:$0xff]
    %v433 = vld [vmem:[#allocation5 + $0xa60] sm:$0xf]
    %v434 = vld [vmem:[#allocation5 + $0xa64] sm:$0xff]
    %v435 = vld [vmem:[#allocation5 + $0xa6c] sm:$0xff]
    %v436 = vld [vmem:[#allocation5 + $0xa74] sm:$0xff]
    %v437 = vld [vmem:[#allocation5 + $0xa7c] sm:$0xf]
    %v438 = vld [vmem:[#allocation5 + $0xa80] sm:$0xff]
    %v439 = vld [vmem:[#allocation5 + $0xa88] sm:$0xff]
    %v440 = vld [vmem:[#allocation5 + $0xa90] sm:$0xff]
    %v441 = vld [vmem:[#allocation5 + $0xa98] sm:$0xf]
    %v442 = vld [vmem:[#allocation5 + $0xa9c] sm:$0xff]
    %v443 = vld [vmem:[#allocation5 + $0xaa4] sm:$0xff]
    %v444 = vld [vmem:[#allocation5 + $0xaac] sm:$0xff]
    %v445 = vld [vmem:[#allocation5 + $0xab4] sm:$0xf]
    %v446 = vld [vmem:[#allocation7] sm:$0xff]
    %v448 = vlaneseq
    %v449 = vshrl.u32 %v448, 7
    %v450 = vsub.s32 0, %v449
    %v451 = vrot.slane %v446, %v450
    %v452 = vlaneseq
    %v453 = vshrl.u32 %v452, 7
    %v454 = vsub.s32 1, %v453
    %v455 = vrot.slane %v446, %v454
    %v456 = vlaneseq
    %v457 = vshrl.u32 %v456, 7
    %v458 = vsub.s32 2, %v457
    %v459 = vrot.slane %v446, %v458
    %v460 = vlaneseq
    %v461 = vshrl.u32 %v460, 7
    %v462 = vsub.s32 3, %v461
    %v463 = vrot.slane %v446, %v462
    %v464 = vlaneseq
    %v465 = vshrl.u32 %v464, 7
    %v466 = vsub.s32 4, %v465
    %v467 = vrot.slane %v446, %v466
    %v468 = vlaneseq
    %v469 = vshrl.u32 %v468, 7
    %v470 = vsub.s32 5, %v469
    %v471 = vrot.slane %v446, %v470
    %v472 = vlaneseq
    %v473 = vshrl.u32 %v472, 7
    %v474 = vsub.s32 6, %v473
    %v475 = vrot.slane %v446, %v474
    %v484 = vcombine.high %v53, %v53
    %v486 = vunpack.c.l.s4 1966171168
    %v487 = vunpack.c.0.s8 %v486
    %v488 = vlaneseq
    %v489 = vshrl.u32 %v488, 7
    %v490 = vsub.s32 %v487, %v489
    %v491 = vrot.slane %v53, %v490
    %v493 = vunpack.c.l.s4 1966171168
    %v494 = vunpack.c.0.s8 %v493
    %v495 = vlaneseq
    %v496 = vshrl.u32 %v495, 7
    %v497 = vsub.s32 %v494, %v496
    %v498 = vrot.slane %v484, %v497
    %v499 = vcombine.high %v491, %v491
    %v500 = vcombine.high %v498, %v498
    %v502 = vunpack.c.l.s4 1966171168
    %v503 = vunpack.c.0.s8 %v502
    %v504 = vlaneseq
    %v505 = vshrl.u32 %v504, 7
    %v506 = vsub.s32 %v503, %v505
    %v507 = vrot.slane %v491, %v506
    %v509 = vunpack.c.l.s4 1966171168
    %v510 = vunpack.c.0.s8 %v509
    %v511 = vlaneseq
    %v512 = vshrl.u32 %v511, 7
    %v513 = vsub.s32 %v510, %v512
    %v514 = vrot.slane %v498, %v513
    %v516 = vunpack.c.l.s4 1966171168
    %v517 = vunpack.c.0.s8 %v516
    %v518 = vlaneseq
    %v519 = vshrl.u32 %v518, 7
    %v520 = vsub.s32 %v517, %v519
    %v521 = vrot.slane %v499, %v520
    %v523 = vunpack.c.l.s4 1966171168
    %v524 = vunpack.c.0.s8 %v523
    %v525 = vlaneseq
    %v526 = vshrl.u32 %v525, 7
    %v527 = vsub.s32 %v524, %v526
    %v528 = vrot.slane %v500, %v527
    %v529 = vcombine.high %v507, %v507
    %v530 = vcombine.high %v514, %v514
    %v531 = vcombine.high %v521, %v521
    %v930 = vunpack.c.l.b16 %v54
    %v931 = vunpack.c.h.b16 %v54
    %v932 = vunpack.c.l.b16 %v55
    %v933 = vunpack.c.h.b16 %v55
    %v934 = vunpack.c.l.b16 %v56
    %v935 = vunpack.c.h.b16 %v56
    %v936 = vunpack.c.l.b16 %v57
    %v937 = vunpack.c.l.b16 %v58
    %v938 = vunpack.c.h.b16 %v58
    %v939 = vunpack.c.l.b16 %v59
    %v940 = vunpack.c.h.b16 %v59
    %v941 = vunpack.c.l.b16 %v60
    %v942 = vunpack.c.h.b16 %v60
    %v943 = vunpack.c.l.b16 %v61
    %v944 = vunpack.c.l.b16 %v62
    %v945 = vunpack.c.h.b16 %v62
    %v946 = vunpack.c.l.b16 %v63
    %v947 = vunpack.c.h.b16 %v63
    %v948 = vunpack.c.l.b16 %v64
    %v949 = vunpack.c.h.b16 %v64
    %v950 = vunpack.c.l.b16 %v65
    %v951 = vunpack.c.l.b16 %v66
    %v952 = vunpack.c.h.b16 %v66
    %v953 = vunpack.c.l.b16 %v67
    %v954 = vunpack.c.h.b16 %v67
    %v955 = vunpack.c.l.b16 %v68
    %v956 = vunpack.c.h.b16 %v68
    %v957 = vunpack.c.l.b16 %v69
    %v958 = vunpack.c.l.b16 %v70
    %v959 = vunpack.c.h.b16 %v70
    %v960 = vunpack.c.l.b16 %v71
    %v961 = vunpack.c.h.b16 %v71
    %v962 = vunpack.c.l.b16 %v72
    %v963 = vunpack.c.h.b16 %v72
    %v964 = vunpack.c.l.b16 %v73
    %v965 = vunpack.c.l.b16 %v74
    %v966 = vunpack.c.h.b16 %v74
    %v967 = vunpack.c.l.b16 %v75
    %v968 = vunpack.c.h.b16 %v75
    %v969 = vunpack.c.l.b16 %v76
    %v970 = vunpack.c.h.b16 %v76
    %v971 = vunpack.c.l.b16 %v77
    %v972 = vunpack.c.l.b16 %v78
    %v973 = vunpack.c.h.b16 %v78
    %v974 = vunpack.c.l.b16 %v79
    %v975 = vunpack.c.h.b16 %v79
    %v976 = vunpack.c.l.b16 %v80
    %v977 = vunpack.c.h.b16 %v80
    %v978 = vunpack.c.l.b16 %v81
    %v979 = vunpack.c.l.b16 %v82
    %v980 = vunpack.c.h.b16 %v82
    %v981 = vunpack.c.l.b16 %v83
    %v982 = vunpack.c.h.b16 %v83
    %v983 = vunpack.c.l.b16 %v84
    %v984 = vunpack.c.h.b16 %v84
    %v985 = vunpack.c.l.b16 %v85
    %v986 = vunpack.c.l.b16 %v86
    %v987 = vunpack.c.h.b16 %v86
    %v988 = vunpack.c.l.b16 %v87
    %v989 = vunpack.c.h.b16 %v87
    %v990 = vunpack.c.l.b16 %v88
    %v991 = vunpack.c.h.b16 %v88
    %v992 = vunpack.c.l.b16 %v89
    %v993 = vunpack.c.l.b16 %v90
    %v994 = vunpack.c.h.b16 %v90
    %v995 = vunpack.c.l.b16 %v91
    %v996 = vunpack.c.h.b16 %v91
    %v997 = vunpack.c.l.b16 %v92
    %v998 = vunpack.c.h.b16 %v92
    %v999 = vunpack.c.l.b16 %v93
    %v1000 = vunpack.c.l.b16 %v94
    %v1001 = vunpack.c.h.b16 %v94
    %v1002 = vunpack.c.l.b16 %v95
    %v1003 = vunpack.c.h.b16 %v95
    %v1004 = vunpack.c.l.b16 %v96
    %v1005 = vunpack.c.h.b16 %v96
    %v1006 = vunpack.c.l.b16 %v97
    %v1007 = vunpack.c.l.b16 %v98
    %v1008 = vunpack.c.h.b16 %v98
    %v1009 = vunpack.c.l.b16 %v99
    %v1010 = vunpack.c.h.b16 %v99
    %v1011 = vunpack.c.l.b16 %v100
    %v1012 = vunpack.c.h.b16 %v100
    %v1013 = vunpack.c.l.b16 %v101
    %v1014 = vunpack.c.l.b16 %v102
    %v1015 = vunpack.c.h.b16 %v102
    %v1016 = vunpack.c.l.b16 %v103
    %v1017 = vunpack.c.h.b16 %v103
    %v1018 = vunpack.c.l.b16 %v104
    %v1019 = vunpack.c.h.b16 %v104
    %v1020 = vunpack.c.l.b16 %v105
    %v1021 = vunpack.c.l.b16 %v106
    %v1022 = vunpack.c.h.b16 %v106
    %v1023 = vunpack.c.l.b16 %v107
    %v1024 = vunpack.c.h.b16 %v107
    %v1025 = vunpack.c.l.b16 %v108
    %v1026 = vunpack.c.h.b16 %v108
    %v1027 = vunpack.c.l.b16 %v109
    %v1028 = vunpack.c.l.b16 %v110
    %v1029 = vunpack.c.h.b16 %v110
    %v1030 = vunpack.c.l.b16 %v111
    %v1031 = vunpack.c.h.b16 %v111
    %v1032 = vunpack.c.l.b16 %v112
    %v1033 = vunpack.c.h.b16 %v112
    %v1034 = vunpack.c.l.b16 %v113
    %v1035 = vunpack.c.l.b16 %v114
    %v1036 = vunpack.c.h.b16 %v114
    %v1037 = vunpack.c.l.b16 %v115
    %v1038 = vunpack.c.h.b16 %v115
    %v1039 = vunpack.c.l.b16 %v116
    %v1040 = vunpack.c.h.b16 %v116
    %v1041 = vunpack.c.l.b16 %v117
    %v1042 = vunpack.c.l.b16 %v118
    %v1043 = vunpack.c.h.b16 %v118
    %v1044 = vunpack.c.l.b16 %v119
    %v1045 = vunpack.c.h.b16 %v119
    %v1046 = vunpack.c.l.b16 %v120
    %v1047 = vunpack.c.h.b16 %v120
    %v1048 = vunpack.c.l.b16 %v121
    %v1049 = vunpack.c.l.b16 %v122
    %v1050 = vunpack.c.h.b16 %v122
    %v1051 = vunpack.c.l.b16 %v123
    %v1052 = vunpack.c.h.b16 %v123
    %v1053 = vunpack.c.l.b16 %v124
    %v1054 = vunpack.c.h.b16 %v124
    %v1055 = vunpack.c.l.b16 %v125
    %v1056 = vunpack.c.l.b16 %v126
    %v1057 = vunpack.c.h.b16 %v126
    %v1058 = vunpack.c.l.b16 %v127
    %v1059 = vunpack.c.h.b16 %v127
    %v1060 = vunpack.c.l.b16 %v128
    %v1061 = vunpack.c.h.b16 %v128
    %v1062 = vunpack.c.l.b16 %v129
    %v1063 = vunpack.c.l.b16 %v130
    %v1064 = vunpack.c.h.b16 %v130
    %v1065 = vunpack.c.l.b16 %v131
    %v1066 = vunpack.c.h.b16 %v131
    %v1067 = vunpack.c.l.b16 %v132
    %v1068 = vunpack.c.h.b16 %v132
    %v1069 = vunpack.c.l.b16 %v133
    %v1070 = vunpack.c.l.b16 %v134
    %v1071 = vunpack.c.h.b16 %v134
    %v1072 = vunpack.c.l.b16 %v135
    %v1073 = vunpack.c.h.b16 %v135
    %v1074 = vunpack.c.l.b16 %v136
    %v1075 = vunpack.c.h.b16 %v136
    %v1076 = vunpack.c.l.b16 %v137
    %v1077 = vunpack.c.l.b16 %v138
    %v1078 = vunpack.c.h.b16 %v138
    %v1079 = vunpack.c.l.b16 %v139
    %v1080 = vunpack.c.h.b16 %v139
    %v1081 = vunpack.c.l.b16 %v140
    %v1082 = vunpack.c.h.b16 %v140
    %v1083 = vunpack.c.l.b16 %v141
    %v1084 = vunpack.c.l.b16 %v142
    %v1085 = vunpack.c.h.b16 %v142
    %v1086 = vunpack.c.l.b16 %v143
    %v1087 = vunpack.c.h.b16 %v143
    %v1088 = vunpack.c.l.b16 %v144
    %v1089 = vunpack.c.h.b16 %v144
    %v1090 = vunpack.c.l.b16 %v145
    %v1091 = vunpack.c.l.b16 %v146
    %v1092 = vunpack.c.h.b16 %v146
    %v1093 = vunpack.c.l.b16 %v147
    %v1094 = vunpack.c.h.b16 %v147
    %v1095 = vunpack.c.l.b16 %v148
    %v1096 = vunpack.c.h.b16 %v148
    %v1097 = vunpack.c.l.b16 %v149
    %v1098 = vunpack.c.l.b16 %v150
    %v1099 = vunpack.c.h.b16 %v150
    %v1100 = vunpack.c.l.b16 %v151
    %v1101 = vunpack.c.h.b16 %v151
    %v1102 = vunpack.c.l.b16 %v152
    %v1103 = vunpack.c.h.b16 %v152
    %v1104 = vunpack.c.l.b16 %v153
    %v1105 = vunpack.c.l.b16 %v154
    %v1106 = vunpack.c.h.b16 %v154
    %v1107 = vunpack.c.l.b16 %v155
    %v1108 = vunpack.c.h.b16 %v155
    %v1109 = vunpack.c.l.b16 %v156
    %v1110 = vunpack.c.h.b16 %v156
    %v1111 = vunpack.c.l.b16 %v157
    %v1112 = vunpack.c.l.b16 %v158
    %v1113 = vunpack.c.h.b16 %v158
    %v1114 = vunpack.c.l.b16 %v159
    %v1115 = vunpack.c.h.b16 %v159
    %v1116 = vunpack.c.l.b16 %v160
    %v1117 = vunpack.c.h.b16 %v160
    %v1118 = vunpack.c.l.b16 %v161
    %v1119 = vunpack.c.l.b16 %v162
    %v1120 = vunpack.c.h.b16 %v162
    %v1121 = vunpack.c.l.b16 %v163
    %v1122 = vunpack.c.h.b16 %v163
    %v1123 = vunpack.c.l.b16 %v164
    %v1124 = vunpack.c.h.b16 %v164
    %v1125 = vunpack.c.l.b16 %v165
    %v1126 = vunpack.c.l.b16 %v166
    %v1127 = vunpack.c.h.b16 %v166
    %v1128 = vunpack.c.l.b16 %v167
    %v1129 = vunpack.c.h.b16 %v167
    %v1130 = vunpack.c.l.b16 %v168
    %v1131 = vunpack.c.h.b16 %v168
    %v1132 = vunpack.c.l.b16 %v169
    %v1133 = vunpack.c.l.b16 %v170
    %v1134 = vunpack.c.h.b16 %v170
    %v1135 = vunpack.c.l.b16 %v171
    %v1136 = vunpack.c.h.b16 %v171
    %v1137 = vunpack.c.l.b16 %v172
    %v1138 = vunpack.c.h.b16 %v172
    %v1139 = vunpack.c.l.b16 %v173
    %v1140 = vunpack.c.l.b16 %v174
    %v1141 = vunpack.c.h.b16 %v174
    %v1142 = vunpack.c.l.b16 %v175
    %v1143 = vunpack.c.h.b16 %v175
    %v1144 = vunpack.c.l.b16 %v176
    %v1145 = vunpack.c.h.b16 %v176
    %v1146 = vunpack.c.l.b16 %v177
    %v1147 = vunpack.c.l.b16 %v178
    %v1148 = vunpack.c.h.b16 %v178
    %v1149 = vunpack.c.l.b16 %v179
    %v1150 = vunpack.c.h.b16 %v179
    %v1151 = vunpack.c.l.b16 %v180
    %v1152 = vunpack.c.h.b16 %v180
    %v1153 = vunpack.c.l.b16 %v181
    %v1154 = vunpack.c.l.b16 %v182
    %v1155 = vunpack.c.h.b16 %v182
    %v1156 = vunpack.c.l.b16 %v183
    %v1157 = vunpack.c.h.b16 %v183
    %v1158 = vunpack.c.l.b16 %v184
    %v1159 = vunpack.c.h.b16 %v184
    %v1160 = vunpack.c.l.b16 %v185
    %v1161 = vunpack.c.l.b16 %v186
    %v1162 = vunpack.c.h.b16 %v186
    %v1163 = vunpack.c.l.b16 %v187
    %v1164 = vunpack.c.h.b16 %v187
    %v1165 = vunpack.c.l.b16 %v188
    %v1166 = vunpack.c.h.b16 %v188
    %v1167 = vunpack.c.l.b16 %v189
    %v1168 = vunpack.c.l.b16 %v190
    %v1169 = vunpack.c.h.b16 %v190
    %v1170 = vunpack.c.l.b16 %v191
    %v1171 = vunpack.c.h.b16 %v191
    %v1172 = vunpack.c.l.b16 %v192
    %v1173 = vunpack.c.h.b16 %v192
    %v1174 = vunpack.c.l.b16 %v193
    %v1175 = vunpack.c.l.b16 %v194
    %v1176 = vunpack.c.h.b16 %v194
    %v1177 = vunpack.c.l.b16 %v195
    %v1178 = vunpack.c.h.b16 %v195
    %v1179 = vunpack.c.l.b16 %v196
    %v1180 = vunpack.c.h.b16 %v196
    %v1181 = vunpack.c.l.b16 %v197
    %v1182 = vunpack.c.l.b16 %v198
    %v1183 = vunpack.c.h.b16 %v198
    %v1184 = vunpack.c.l.b16 %v199
    %v1185 = vunpack.c.h.b16 %v199
    %v1186 = vunpack.c.l.b16 %v200
    %v1187 = vunpack.c.h.b16 %v200
    %v1188 = vunpack.c.l.b16 %v201
    %v1189 = vunpack.c.l.b16 %v202
    %v1190 = vunpack.c.h.b16 %v202
    %v1191 = vunpack.c.l.b16 %v203
    %v1192 = vunpack.c.h.b16 %v203
    %v1193 = vunpack.c.l.b16 %v204
    %v1194 = vunpack.c.h.b16 %v204
    %v1195 = vunpack.c.l.b16 %v205
    %v1196 = vunpack.c.l.b16 %v206
    %v1197 = vunpack.c.h.b16 %v206
    %v1198 = vunpack.c.l.b16 %v207
    %v1199 = vunpack.c.h.b16 %v207
    %v1200 = vunpack.c.l.b16 %v208
    %v1201 = vunpack.c.h.b16 %v208
    %v1202 = vunpack.c.l.b16 %v209
    %v1203 = vunpack.c.l.b16 %v210
    %v1204 = vunpack.c.h.b16 %v210
    %v1205 = vunpack.c.l.b16 %v211
    %v1206 = vunpack.c.h.b16 %v211
    %v1207 = vunpack.c.l.b16 %v212
    %v1208 = vunpack.c.h.b16 %v212
    %v1209 = vunpack.c.l.b16 %v213
    %v1210 = vunpack.c.l.b16 %v214
    %v1211 = vunpack.c.h.b16 %v214
    %v1212 = vunpack.c.l.b16 %v215
    %v1213 = vunpack.c.h.b16 %v215
    %v1214 = vunpack.c.l.b16 %v216
    %v1215 = vunpack.c.h.b16 %v216
    %v1216 = vunpack.c.l.b16 %v217
    %v1217 = vunpack.c.l.b16 %v218
    %v1218 = vunpack.c.h.b16 %v218
    %v1219 = vunpack.c.l.b16 %v219
    %v1220 = vunpack.c.h.b16 %v219
    %v1221 = vunpack.c.l.b16 %v220
    %v1222 = vunpack.c.h.b16 %v220
    %v1223 = vunpack.c.l.b16 %v221
    %v1224 = vunpack.c.l.b16 %v222
    %v1225 = vunpack.c.h.b16 %v222
    %v1226 = vunpack.c.l.b16 %v223
    %v1227 = vunpack.c.h.b16 %v223
    %v1228 = vunpack.c.l.b16 %v224
    %v1229 = vunpack.c.h.b16 %v224
    %v1230 = vunpack.c.l.b16 %v225
    %v1231 = vunpack.c.l.b16 %v226
    %v1232 = vunpack.c.h.b16 %v226
    %v1233 = vunpack.c.l.b16 %v227
    %v1234 = vunpack.c.h.b16 %v227
    %v1235 = vunpack.c.l.b16 %v228
    %v1236 = vunpack.c.h.b16 %v228
    %v1237 = vunpack.c.l.b16 %v229
    %v1238 = vunpack.c.l.b16 %v230
    %v1239 = vunpack.c.h.b16 %v230
    %v1240 = vunpack.c.l.b16 %v231
    %v1241 = vunpack.c.h.b16 %v231
    %v1242 = vunpack.c.l.b16 %v232
    %v1243 = vunpack.c.h.b16 %v232
    %v1244 = vunpack.c.l.b16 %v233
    %v1245 = vunpack.c.l.b16 %v234
    %v1246 = vunpack.c.h.b16 %v234
    %v1247 = vunpack.c.l.b16 %v235
    %v1248 = vunpack.c.h.b16 %v235
    %v1249 = vunpack.c.l.b16 %v236
    %v1250 = vunpack.c.h.b16 %v236
    %v1251 = vunpack.c.l.b16 %v237
    %v1252 = vunpack.c.l.b16 %v238
    %v1253 = vunpack.c.h.b16 %v238
    %v1254 = vunpack.c.l.b16 %v239
    %v1255 = vunpack.c.h.b16 %v239
    %v1256 = vunpack.c.l.b16 %v240
    %v1257 = vunpack.c.h.b16 %v240
    %v1258 = vunpack.c.l.b16 %v241
    %v1259 = vunpack.c.l.b16 %v242
    %v1260 = vunpack.c.h.b16 %v242
    %v1261 = vunpack.c.l.b16 %v243
    %v1262 = vunpack.c.h.b16 %v243
    %v1263 = vunpack.c.l.b16 %v244
    %v1264 = vunpack.c.h.b16 %v244
    %v1265 = vunpack.c.l.b16 %v245
    %v1266 = vunpack.c.l.b16 %v246
    %v1267 = vunpack.c.h.b16 %v246
    %v1268 = vunpack.c.l.b16 %v247
    %v1269 = vunpack.c.h.b16 %v247
    %v1270 = vunpack.c.l.b16 %v248
    %v1271 = vunpack.c.h.b16 %v248
    %v1272 = vunpack.c.l.b16 %v249
    %v1273 = vunpack.c.l.b16 %v250
    %v1274 = vunpack.c.h.b16 %v250
    %v1275 = vunpack.c.l.b16 %v251
    %v1276 = vunpack.c.h.b16 %v251
    %v1277 = vunpack.c.l.b16 %v252
    %v1278 = vunpack.c.h.b16 %v252
    %v1279 = vunpack.c.l.b16 %v253
    %v1280 = vunpack.c.l.b16 %v254
    %v1281 = vunpack.c.h.b16 %v254
    %v1282 = vunpack.c.l.b16 %v255
    %v1283 = vunpack.c.h.b16 %v255
    %v1284 = vunpack.c.l.b16 %v256
    %v1285 = vunpack.c.h.b16 %v256
    %v1286 = vunpack.c.l.b16 %v257
    %v1287 = vunpack.c.l.b16 %v258
    %v1288 = vunpack.c.h.b16 %v258
    %v1289 = vunpack.c.l.b16 %v259
    %v1290 = vunpack.c.h.b16 %v259
    %v1291 = vunpack.c.l.b16 %v260
    %v1292 = vunpack.c.h.b16 %v260
    %v1293 = vunpack.c.l.b16 %v261
    %v1294 = vunpack.c.l.b16 %v262
    %v1295 = vunpack.c.h.b16 %v262
    %v1296 = vunpack.c.l.b16 %v263
    %v1297 = vunpack.c.h.b16 %v263
    %v1298 = vunpack.c.l.b16 %v264
    %v1299 = vunpack.c.h.b16 %v264
    %v1300 = vunpack.c.l.b16 %v265
    %v1301 = vunpack.c.l.b16 %v266
    %v1302 = vunpack.c.h.b16 %v266
    %v1303 = vunpack.c.l.b16 %v267
    %v1304 = vunpack.c.h.b16 %v267
    %v1305 = vunpack.c.l.b16 %v268
    %v1306 = vunpack.c.h.b16 %v268
    %v1307 = vunpack.c.l.b16 %v269
    %v1308 = vunpack.c.l.b16 %v270
    %v1309 = vunpack.c.h.b16 %v270
    %v1310 = vunpack.c.l.b16 %v271
    %v1311 = vunpack.c.h.b16 %v271
    %v1312 = vunpack.c.l.b16 %v272
    %v1313 = vunpack.c.h.b16 %v272
    %v1314 = vunpack.c.l.b16 %v273
    %v1315 = vunpack.c.l.b16 %v274
    %v1316 = vunpack.c.h.b16 %v274
    %v1317 = vunpack.c.l.b16 %v275
    %v1318 = vunpack.c.h.b16 %v275
    %v1319 = vunpack.c.l.b16 %v276
    %v1320 = vunpack.c.h.b16 %v276
    %v1321 = vunpack.c.l.b16 %v277
    %v1322 = vunpack.c.l.b16 %v278
    %v1323 = vunpack.c.h.b16 %v278
    %v1324 = vunpack.c.l.b16 %v279
    %v1325 = vunpack.c.h.b16 %v279
    %v1326 = vunpack.c.l.b16 %v280
    %v1327 = vunpack.c.h.b16 %v280
    %v1328 = vunpack.c.l.b16 %v281
    %v1329 = vunpack.c.l.b16 %v282
    %v1330 = vunpack.c.h.b16 %v282
    %v1331 = vunpack.c.l.b16 %v283
    %v1332 = vunpack.c.h.b16 %v283
    %v1333 = vunpack.c.l.b16 %v284
    %v1334 = vunpack.c.h.b16 %v284
    %v1335 = vunpack.c.l.b16 %v285
    %v1336 = vunpack.c.l.b16 %v286
    %v1337 = vunpack.c.h.b16 %v286
    %v1338 = vunpack.c.l.b16 %v287
    %v1339 = vunpack.c.h.b16 %v287
    %v1340 = vunpack.c.l.b16 %v288
    %v1341 = vunpack.c.h.b16 %v288
    %v1342 = vunpack.c.l.b16 %v289
    %v1343 = vunpack.c.l.b16 %v290
    %v1344 = vunpack.c.h.b16 %v290
    %v1345 = vunpack.c.l.b16 %v291
    %v1346 = vunpack.c.h.b16 %v291
    %v1347 = vunpack.c.l.b16 %v292
    %v1348 = vunpack.c.h.b16 %v292
    %v1349 = vunpack.c.l.b16 %v293
    %v1350 = vunpack.c.l.b16 %v294
    %v1351 = vunpack.c.h.b16 %v294
    %v1352 = vunpack.c.l.b16 %v295
    %v1353 = vunpack.c.h.b16 %v295
    %v1354 = vunpack.c.l.b16 %v296
    %v1355 = vunpack.c.h.b16 %v296
    %v1356 = vunpack.c.l.b16 %v297
    %v1357 = vunpack.c.l.b16 %v298
    %v1358 = vunpack.c.h.b16 %v298
    %v1359 = vunpack.c.l.b16 %v299
    %v1360 = vunpack.c.h.b16 %v299
    %v1361 = vunpack.c.l.b16 %v300
    %v1362 = vunpack.c.h.b16 %v300
    %v1363 = vunpack.c.l.b16 %v301
    %v1364 = vunpack.c.l.b16 %v302
    %v1365 = vunpack.c.h.b16 %v302
    %v1366 = vunpack.c.l.b16 %v303
    %v1367 = vunpack.c.h.b16 %v303
    %v1368 = vunpack.c.l.b16 %v304
    %v1369 = vunpack.c.h.b16 %v304
    %v1370 = vunpack.c.l.b16 %v305
    %v1371 = vunpack.c.l.b16 %v306
    %v1372 = vunpack.c.h.b16 %v306
    %v1373 = vunpack.c.l.b16 %v307
    %v1374 = vunpack.c.h.b16 %v307
    %v1375 = vunpack.c.l.b16 %v308
    %v1376 = vunpack.c.h.b16 %v308
    %v1377 = vunpack.c.l.b16 %v309
    %v1378 = vunpack.c.l.b16 %v310
    %v1379 = vunpack.c.h.b16 %v310
    %v1380 = vunpack.c.l.b16 %v311
    %v1381 = vunpack.c.h.b16 %v311
    %v1382 = vunpack.c.l.b16 %v312
    %v1383 = vunpack.c.h.b16 %v312
    %v1384 = vunpack.c.l.b16 %v313
    %v1385 = vunpack.c.l.b16 %v314
    %v1386 = vunpack.c.h.b16 %v314
    %v1387 = vunpack.c.l.b16 %v315
    %v1388 = vunpack.c.h.b16 %v315
    %v1389 = vunpack.c.l.b16 %v316
    %v1390 = vunpack.c.h.b16 %v316
    %v1391 = vunpack.c.l.b16 %v317
    %v1392 = vunpack.c.l.b16 %v318
    %v1393 = vunpack.c.h.b16 %v318
    %v1394 = vunpack.c.l.b16 %v319
    %v1395 = vunpack.c.h.b16 %v319
    %v1396 = vunpack.c.l.b16 %v320
    %v1397 = vunpack.c.h.b16 %v320
    %v1398 = vunpack.c.l.b16 %v321
    %v1399 = vunpack.c.l.b16 %v322
    %v1400 = vunpack.c.h.b16 %v322
    %v1401 = vunpack.c.l.b16 %v323
    %v1402 = vunpack.c.h.b16 %v323
    %v1403 = vunpack.c.l.b16 %v324
    %v1404 = vunpack.c.h.b16 %v324
    %v1405 = vunpack.c.l.b16 %v325
    %v1406 = vunpack.c.l.b16 %v326
    %v1407 = vunpack.c.h.b16 %v326
    %v1408 = vunpack.c.l.b16 %v327
    %v1409 = vunpack.c.h.b16 %v327
    %v1410 = vunpack.c.l.b16 %v328
    %v1411 = vunpack.c.h.b16 %v328
    %v1412 = vunpack.c.l.b16 %v329
    %v1413 = vunpack.c.l.b16 %v330
    %v1414 = vunpack.c.h.b16 %v330
    %v1415 = vunpack.c.l.b16 %v331
    %v1416 = vunpack.c.h.b16 %v331
    %v1417 = vunpack.c.l.b16 %v332
    %v1418 = vunpack.c.h.b16 %v332
    %v1419 = vunpack.c.l.b16 %v333
    %v1420 = vunpack.c.l.b16 %v334
    %v1421 = vunpack.c.h.b16 %v334
    %v1422 = vunpack.c.l.b16 %v335
    %v1423 = vunpack.c.h.b16 %v335
    %v1424 = vunpack.c.l.b16 %v336
    %v1425 = vunpack.c.h.b16 %v336
    %v1426 = vunpack.c.l.b16 %v337
    %v1427 = vunpack.c.l.b16 %v338
    %v1428 = vunpack.c.h.b16 %v338
    %v1429 = vunpack.c.l.b16 %v339
    %v1430 = vunpack.c.h.b16 %v339
    %v1431 = vunpack.c.l.b16 %v340
    %v1432 = vunpack.c.h.b16 %v340
    %v1433 = vunpack.c.l.b16 %v341
    %v1434 = vunpack.c.l.b16 %v342
    %v1435 = vunpack.c.h.b16 %v342
    %v1436 = vunpack.c.l.b16 %v343
    %v1437 = vunpack.c.h.b16 %v343
    %v1438 = vunpack.c.l.b16 %v344
    %v1439 = vunpack.c.h.b16 %v344
    %v1440 = vunpack.c.l.b16 %v345
    %v1441 = vunpack.c.l.b16 %v346
    %v1442 = vunpack.c.h.b16 %v346
    %v1443 = vunpack.c.l.b16 %v347
    %v1444 = vunpack.c.h.b16 %v347
    %v1445 = vunpack.c.l.b16 %v348
    %v1446 = vunpack.c.h.b16 %v348
    %v1447 = vunpack.c.l.b16 %v349
    %v1448 = vunpack.c.l.b16 %v350
    %v1449 = vunpack.c.h.b16 %v350
    %v1450 = vunpack.c.l.b16 %v351
    %v1451 = vunpack.c.h.b16 %v351
    %v1452 = vunpack.c.l.b16 %v352
    %v1453 = vunpack.c.h.b16 %v352
    %v1454 = vunpack.c.l.b16 %v353
    %v1455 = vunpack.c.l.b16 %v354
    %v1456 = vunpack.c.h.b16 %v354
    %v1457 = vunpack.c.l.b16 %v355
    %v1458 = vunpack.c.h.b16 %v355
    %v1459 = vunpack.c.l.b16 %v356
    %v1460 = vunpack.c.h.b16 %v356
    %v1461 = vunpack.c.l.b16 %v357
    %v1462 = vunpack.c.l.b16 %v358
    %v1463 = vunpack.c.h.b16 %v358
    %v1464 = vunpack.c.l.b16 %v359
    %v1465 = vunpack.c.h.b16 %v359
    %v1466 = vunpack.c.l.b16 %v360
    %v1467 = vunpack.c.h.b16 %v360
    %v1468 = vunpack.c.l.b16 %v361
    %v1469 = vunpack.c.l.b16 %v362
    %v1470 = vunpack.c.h.b16 %v362
    %v1471 = vunpack.c.l.b16 %v363
    %v1472 = vunpack.c.h.b16 %v363
    %v1473 = vunpack.c.l.b16 %v364
    %v1474 = vunpack.c.h.b16 %v364
    %v1475 = vunpack.c.l.b16 %v365
    %v1476 = vunpack.c.l.b16 %v366
    %v1477 = vunpack.c.h.b16 %v366
    %v1478 = vunpack.c.l.b16 %v367
    %v1479 = vunpack.c.h.b16 %v367
    %v1480 = vunpack.c.l.b16 %v368
    %v1481 = vunpack.c.h.b16 %v368
    %v1482 = vunpack.c.l.b16 %v369
    %v1483 = vunpack.c.l.b16 %v370
    %v1484 = vunpack.c.h.b16 %v370
    %v1485 = vunpack.c.l.b16 %v371
    %v1486 = vunpack.c.h.b16 %v371
    %v1487 = vunpack.c.l.b16 %v372
    %v1488 = vunpack.c.h.b16 %v372
    %v1489 = vunpack.c.l.b16 %v373
    %v1490 = vunpack.c.l.b16 %v374
    %v1491 = vunpack.c.h.b16 %v374
    %v1492 = vunpack.c.l.b16 %v375
    %v1493 = vunpack.c.h.b16 %v375
    %v1494 = vunpack.c.l.b16 %v376
    %v1495 = vunpack.c.h.b16 %v376
    %v1496 = vunpack.c.l.b16 %v377
    %v1497 = vunpack.c.l.b16 %v378
    %v1498 = vunpack.c.h.b16 %v378
    %v1499 = vunpack.c.l.b16 %v379
    %v1500 = vunpack.c.h.b16 %v379
    %v1501 = vunpack.c.l.b16 %v380
    %v1502 = vunpack.c.h.b16 %v380
    %v1503 = vunpack.c.l.b16 %v381
    %v1504 = vunpack.c.l.b16 %v382
    %v1505 = vunpack.c.h.b16 %v382
    %v1506 = vunpack.c.l.b16 %v383
    %v1507 = vunpack.c.h.b16 %v383
    %v1508 = vunpack.c.l.b16 %v384
    %v1509 = vunpack.c.h.b16 %v384
    %v1510 = vunpack.c.l.b16 %v385
    %v1511 = vunpack.c.l.b16 %v386
    %v1512 = vunpack.c.h.b16 %v386
    %v1513 = vunpack.c.l.b16 %v387
    %v1514 = vunpack.c.h.b16 %v387
    %v1515 = vunpack.c.l.b16 %v388
    %v1516 = vunpack.c.h.b16 %v388
    %v1517 = vunpack.c.l.b16 %v389
    %v1518 = vunpack.c.l.b16 %v390
    %v1519 = vunpack.c.h.b16 %v390
    %v1520 = vunpack.c.l.b16 %v391
    %v1521 = vunpack.c.h.b16 %v391
    %v1522 = vunpack.c.l.b16 %v392
    %v1523 = vunpack.c.h.b16 %v392
    %v1524 = vunpack.c.l.b16 %v393
    %v1525 = vunpack.c.l.b16 %v394
    %v1526 = vunpack.c.h.b16 %v394
    %v1527 = vunpack.c.l.b16 %v395
    %v1528 = vunpack.c.h.b16 %v395
    %v1529 = vunpack.c.l.b16 %v396
    %v1530 = vunpack.c.h.b16 %v396
    %v1531 = vunpack.c.l.b16 %v397
    %v1532 = vunpack.c.l.b16 %v398
    %v1533 = vunpack.c.h.b16 %v398
    %v1534 = vunpack.c.l.b16 %v399
    %v1535 = vunpack.c.h.b16 %v399
    %v1536 = vunpack.c.l.b16 %v400
    %v1537 = vunpack.c.h.b16 %v400
    %v1538 = vunpack.c.l.b16 %v401
    %v1539 = vunpack.c.l.b16 %v402
    %v1540 = vunpack.c.h.b16 %v402
    %v1541 = vunpack.c.l.b16 %v403
    %v1542 = vunpack.c.h.b16 %v403
    %v1543 = vunpack.c.l.b16 %v404
    %v1544 = vunpack.c.h.b16 %v404
    %v1545 = vunpack.c.l.b16 %v405
    %v1546 = vunpack.c.l.b16 %v406
    %v1547 = vunpack.c.h.b16 %v406
    %v1548 = vunpack.c.l.b16 %v407
    %v1549 = vunpack.c.h.b16 %v407
    %v1550 = vunpack.c.l.b16 %v408
    %v1551 = vunpack.c.h.b16 %v408
    %v1552 = vunpack.c.l.b16 %v409
    %v1553 = vunpack.c.l.b16 %v410
    %v1554 = vunpack.c.h.b16 %v410
    %v1555 = vunpack.c.l.b16 %v411
    %v1556 = vunpack.c.h.b16 %v411
    %v1557 = vunpack.c.l.b16 %v412
    %v1558 = vunpack.c.h.b16 %v412
    %v1559 = vunpack.c.l.b16 %v413
    %v1560 = vunpack.c.l.b16 %v414
    %v1561 = vunpack.c.h.b16 %v414
    %v1562 = vunpack.c.l.b16 %v415
    %v1563 = vunpack.c.h.b16 %v415
    %v1564 = vunpack.c.l.b16 %v416
    %v1565 = vunpack.c.h.b16 %v416
    %v1566 = vunpack.c.l.b16 %v417
    %v1567 = vunpack.c.l.b16 %v418
    %v1568 = vunpack.c.h.b16 %v418
    %v1569 = vunpack.c.l.b16 %v419
    %v1570 = vunpack.c.h.b16 %v419
    %v1571 = vunpack.c.l.b16 %v420
    %v1572 = vunpack.c.h.b16 %v420
    %v1573 = vunpack.c.l.b16 %v421
    %v1574 = vunpack.c.l.b16 %v422
    %v1575 = vunpack.c.h.b16 %v422
    %v1576 = vunpack.c.l.b16 %v423
    %v1577 = vunpack.c.h.b16 %v423
    %v1578 = vunpack.c.l.b16 %v424
    %v1579 = vunpack.c.h.b16 %v424
    %v1580 = vunpack.c.l.b16 %v425
    %v1581 = vunpack.c.l.b16 %v426
    %v1582 = vunpack.c.h.b16 %v426
    %v1583 = vunpack.c.l.b16 %v427
    %v1584 = vunpack.c.h.b16 %v427
    %v1585 = vunpack.c.l.b16 %v428
    %v1586 = vunpack.c.h.b16 %v428
    %v1587 = vunpack.c.l.b16 %v429
    %v1588 = vunpack.c.l.b16 %v430
    %v1589 = vunpack.c.h.b16 %v430
    %v1590 = vunpack.c.l.b16 %v431
    %v1591 = vunpack.c.h.b16 %v431
    %v1592 = vunpack.c.l.b16 %v432
    %v1593 = vunpack.c.h.b16 %v432
    %v1594 = vunpack.c.l.b16 %v433
    %v1595 = vunpack.c.l.b16 %v434
    %v1596 = vunpack.c.h.b16 %v434
    %v1597 = vunpack.c.l.b16 %v435
    %v1598 = vunpack.c.h.b16 %v435
    %v1599 = vunpack.c.l.b16 %v436
    %v1600 = vunpack.c.h.b16 %v436
    %v1601 = vunpack.c.l.b16 %v437
    %v1602 = vunpack.c.l.b16 %v438
    %v1603 = vunpack.c.h.b16 %v438
    %v1604 = vunpack.c.l.b16 %v439
    %v1605 = vunpack.c.h.b16 %v439
    %v1606 = vunpack.c.l.b16 %v440
    %v1607 = vunpack.c.h.b16 %v440
    %v1608 = vunpack.c.l.b16 %v441
    %v1609 = vunpack.c.l.b16 %v442
    %v1610 = vunpack.c.h.b16 %v442
    %v1611 = vunpack.c.l.b16 %v443
    %v1612 = vunpack.c.h.b16 %v443
    %v1613 = vunpack.c.l.b16 %v444
    %v1614 = vunpack.c.h.b16 %v444
    %v1615 = vunpack.c.l.b16 %v445
    %v1616 = vpack.c.b16 %v937, %v930
    %v1617 = vpack.c.b16 %v938, %v931
    %v1618 = vpack.c.b16 %v939, %v932
    %v1619 = vpack.c.b16 %v940, %v933
    %v1620 = vpack.c.b16 %v941, %v934
    %v1621 = vpack.c.b16 %v942, %v935
    %v1622 = vpack.c.b16 %v943, %v936
    %v1623 = vpack.c.b16 %v951, %v944
    %v1624 = vpack.c.b16 %v952, %v945
    %v1625 = vpack.c.b16 %v953, %v946
    %v1626 = vpack.c.b16 %v954, %v947
    %v1627 = vpack.c.b16 %v955, %v948
    %v1628 = vpack.c.b16 %v956, %v949
    %v1629 = vpack.c.b16 %v957, %v950
    %v1630 = vpack.c.b16 %v965, %v958
    %v1631 = vpack.c.b16 %v966, %v959
    %v1632 = vpack.c.b16 %v967, %v960
    %v1633 = vpack.c.b16 %v968, %v961
    %v1634 = vpack.c.b16 %v969, %v962
    %v1635 = vpack.c.b16 %v970, %v963
    %v1636 = vpack.c.b16 %v971, %v964
    %v1637 = vpack.c.b16 %v979, %v972
    %v1638 = vpack.c.b16 %v980, %v973
    %v1639 = vpack.c.b16 %v981, %v974
    %v1640 = vpack.c.b16 %v982, %v975
    %v1641 = vpack.c.b16 %v983, %v976
    %v1642 = vpack.c.b16 %v984, %v977
    %v1643 = vpack.c.b16 %v985, %v978
    %v1644 = vpack.c.b16 %v993, %v986
    %v1645 = vpack.c.b16 %v994, %v987
    %v1646 = vpack.c.b16 %v995, %v988
    %v1647 = vpack.c.b16 %v996, %v989
    %v1648 = vpack.c.b16 %v997, %v990
    %v1649 = vpack.c.b16 %v998, %v991
    %v1650 = vpack.c.b16 %v999, %v992
    %v1651 = vpack.c.b16 %v1007, %v1000
    %v1652 = vpack.c.b16 %v1008, %v1001
    %v1653 = vpack.c.b16 %v1009, %v1002
    %v1654 = vpack.c.b16 %v1010, %v1003
    %v1655 = vpack.c.b16 %v1011, %v1004
    %v1656 = vpack.c.b16 %v1012, %v1005
    %v1657 = vpack.c.b16 %v1013, %v1006
    %v1658 = vpack.c.b16 %v1021, %v1014
    %v1659 = vpack.c.b16 %v1022, %v1015
    %v1660 = vpack.c.b16 %v1023, %v1016
    %v1661 = vpack.c.b16 %v1024, %v1017
    %v1662 = vpack.c.b16 %v1025, %v1018
    %v1663 = vpack.c.b16 %v1026, %v1019
    %v1664 = vpack.c.b16 %v1027, %v1020
    %v1665 = vpack.c.b16 %v1035, %v1028
    %v1666 = vpack.c.b16 %v1036, %v1029
    %v1667 = vpack.c.b16 %v1037, %v1030
    %v1668 = vpack.c.b16 %v1038, %v1031
    %v1669 = vpack.c.b16 %v1039, %v1032
    %v1670 = vpack.c.b16 %v1040, %v1033
    %v1671 = vpack.c.b16 %v1041, %v1034
    %v1672 = vpack.c.b16 %v1049, %v1042
    %v1673 = vpack.c.b16 %v1050, %v1043
    %v1674 = vpack.c.b16 %v1051, %v1044
    %v1675 = vpack.c.b16 %v1052, %v1045
    %v1676 = vpack.c.b16 %v1053, %v1046
    %v1677 = vpack.c.b16 %v1054, %v1047
    %v1678 = vpack.c.b16 %v1055, %v1048
    %v1679 = vpack.c.b16 %v1063, %v1056
    %v1680 = vpack.c.b16 %v1064, %v1057
    %v1681 = vpack.c.b16 %v1065, %v1058
    %v1682 = vpack.c.b16 %v1066, %v1059
    %v1683 = vpack.c.b16 %v1067, %v1060
    %v1684 = vpack.c.b16 %v1068, %v1061
    %v1685 = vpack.c.b16 %v1069, %v1062
    %v1686 = vpack.c.b16 %v1077, %v1070
    %v1687 = vpack.c.b16 %v1078, %v1071
    %v1688 = vpack.c.b16 %v1079, %v1072
    %v1689 = vpack.c.b16 %v1080, %v1073
    %v1690 = vpack.c.b16 %v1081, %v1074
    %v1691 = vpack.c.b16 %v1082, %v1075
    %v1692 = vpack.c.b16 %v1083, %v1076
    %v1693 = vpack.c.b16 %v1091, %v1084
    %v1694 = vpack.c.b16 %v1092, %v1085
    %v1695 = vpack.c.b16 %v1093, %v1086
    %v1696 = vpack.c.b16 %v1094, %v1087
    %v1697 = vpack.c.b16 %v1095, %v1088
    %v1698 = vpack.c.b16 %v1096, %v1089
    %v1699 = vpack.c.b16 %v1097, %v1090
    %v1700 = vpack.c.b16 %v1105, %v1098
    %v1701 = vpack.c.b16 %v1106, %v1099
    %v1702 = vpack.c.b16 %v1107, %v1100
    %v1703 = vpack.c.b16 %v1108, %v1101
    %v1704 = vpack.c.b16 %v1109, %v1102
    %v1705 = vpack.c.b16 %v1110, %v1103
    %v1706 = vpack.c.b16 %v1111, %v1104
    %v1707 = vpack.c.b16 %v1119, %v1112
    %v1708 = vpack.c.b16 %v1120, %v1113
    %v1709 = vpack.c.b16 %v1121, %v1114
    %v1710 = vpack.c.b16 %v1122, %v1115
    %v1711 = vpack.c.b16 %v1123, %v1116
    %v1712 = vpack.c.b16 %v1124, %v1117
    %v1713 = vpack.c.b16 %v1125, %v1118
    %v1714 = vpack.c.b16 %v1133, %v1126
    %v1715 = vpack.c.b16 %v1134, %v1127
    %v1716 = vpack.c.b16 %v1135, %v1128
    %v1717 = vpack.c.b16 %v1136, %v1129
    %v1718 = vpack.c.b16 %v1137, %v1130
    %v1719 = vpack.c.b16 %v1138, %v1131
    %v1720 = vpack.c.b16 %v1139, %v1132
    %v1721 = vpack.c.b16 %v1147, %v1140
    %v1722 = vpack.c.b16 %v1148, %v1141
    %v1723 = vpack.c.b16 %v1149, %v1142
    %v1724 = vpack.c.b16 %v1150, %v1143
    %v1725 = vpack.c.b16 %v1151, %v1144
    %v1726 = vpack.c.b16 %v1152, %v1145
    %v1727 = vpack.c.b16 %v1153, %v1146
    %v1728 = vpack.c.b16 %v1161, %v1154
    %v1729 = vpack.c.b16 %v1162, %v1155
    %v1730 = vpack.c.b16 %v1163, %v1156
    %v1731 = vpack.c.b16 %v1164, %v1157
    %v1732 = vpack.c.b16 %v1165, %v1158
    %v1733 = vpack.c.b16 %v1166, %v1159
    %v1734 = vpack.c.b16 %v1167, %v1160
    %v1735 = vpack.c.b16 %v1175, %v1168
    %v1736 = vpack.c.b16 %v1176, %v1169
    %v1737 = vpack.c.b16 %v1177, %v1170
    %v1738 = vpack.c.b16 %v1178, %v1171
    %v1739 = vpack.c.b16 %v1179, %v1172
    %v1740 = vpack.c.b16 %v1180, %v1173
    %v1741 = vpack.c.b16 %v1181, %v1174
    %v1742 = vpack.c.b16 %v1189, %v1182
    %v1743 = vpack.c.b16 %v1190, %v1183
    %v1744 = vpack.c.b16 %v1191, %v1184
    %v1745 = vpack.c.b16 %v1192, %v1185
    %v1746 = vpack.c.b16 %v1193, %v1186
    %v1747 = vpack.c.b16 %v1194, %v1187
    %v1748 = vpack.c.b16 %v1195, %v1188
    %v1749 = vpack.c.b16 %v1203, %v1196
    %v1750 = vpack.c.b16 %v1204, %v1197
    %v1751 = vpack.c.b16 %v1205, %v1198
    %v1752 = vpack.c.b16 %v1206, %v1199
    %v1753 = vpack.c.b16 %v1207, %v1200
    %v1754 = vpack.c.b16 %v1208, %v1201
    %v1755 = vpack.c.b16 %v1209, %v1202
    %v1756 = vpack.c.b16 %v1217, %v1210
    %v1757 = vpack.c.b16 %v1218, %v1211
    %v1758 = vpack.c.b16 %v1219, %v1212
    %v1759 = vpack.c.b16 %v1220, %v1213
    %v1760 = vpack.c.b16 %v1221, %v1214
    %v1761 = vpack.c.b16 %v1222, %v1215
    %v1762 = vpack.c.b16 %v1223, %v1216
    %v1763 = vpack.c.b16 %v1231, %v1224
    %v1764 = vpack.c.b16 %v1232, %v1225
    %v1765 = vpack.c.b16 %v1233, %v1226
    %v1766 = vpack.c.b16 %v1234, %v1227
    %v1767 = vpack.c.b16 %v1235, %v1228
    %v1768 = vpack.c.b16 %v1236, %v1229
    %v1769 = vpack.c.b16 %v1237, %v1230
    %v1770 = vpack.c.b16 %v1245, %v1238
    %v1771 = vpack.c.b16 %v1246, %v1239
    %v1772 = vpack.c.b16 %v1247, %v1240
    %v1773 = vpack.c.b16 %v1248, %v1241
    %v1774 = vpack.c.b16 %v1249, %v1242
    %v1775 = vpack.c.b16 %v1250, %v1243
    %v1776 = vpack.c.b16 %v1251, %v1244
    %v1777 = vpack.c.b16 %v1259, %v1252
    %v1778 = vpack.c.b16 %v1260, %v1253
    %v1779 = vpack.c.b16 %v1261, %v1254
    %v1780 = vpack.c.b16 %v1262, %v1255
    %v1781 = vpack.c.b16 %v1263, %v1256
    %v1782 = vpack.c.b16 %v1264, %v1257
    %v1783 = vpack.c.b16 %v1265, %v1258
    %v1784 = vpack.c.b16 %v1273, %v1266
    %v1785 = vpack.c.b16 %v1274, %v1267
    %v1786 = vpack.c.b16 %v1275, %v1268
    %v1787 = vpack.c.b16 %v1276, %v1269
    %v1788 = vpack.c.b16 %v1277, %v1270
    %v1789 = vpack.c.b16 %v1278, %v1271
    %v1790 = vpack.c.b16 %v1279, %v1272
    %v1791 = vpack.c.b16 %v1287, %v1280
    %v1792 = vpack.c.b16 %v1288, %v1281
    %v1793 = vpack.c.b16 %v1289, %v1282
    %v1794 = vpack.c.b16 %v1290, %v1283
    %v1795 = vpack.c.b16 %v1291, %v1284
    %v1796 = vpack.c.b16 %v1292, %v1285
    %v1797 = vpack.c.b16 %v1293, %v1286
    %v1798 = vpack.c.b16 %v1301, %v1294
    %v1799 = vpack.c.b16 %v1302, %v1295
    %v1800 = vpack.c.b16 %v1303, %v1296
    %v1801 = vpack.c.b16 %v1304, %v1297
    %v1802 = vpack.c.b16 %v1305, %v1298
    %v1803 = vpack.c.b16 %v1306, %v1299
    %v1804 = vpack.c.b16 %v1307, %v1300
    %v1805 = vpack.c.b16 %v1315, %v1308
    %v1806 = vpack.c.b16 %v1316, %v1309
    %v1807 = vpack.c.b16 %v1317, %v1310
    %v1808 = vpack.c.b16 %v1318, %v1311
    %v1809 = vpack.c.b16 %v1319, %v1312
    %v1810 = vpack.c.b16 %v1320, %v1313
    %v1811 = vpack.c.b16 %v1321, %v1314
    %v1812 = vpack.c.b16 %v1329, %v1322
    %v1813 = vpack.c.b16 %v1330, %v1323
    %v1814 = vpack.c.b16 %v1331, %v1324
    %v1815 = vpack.c.b16 %v1332, %v1325
    %v1816 = vpack.c.b16 %v1333, %v1326
    %v1817 = vpack.c.b16 %v1334, %v1327
    %v1818 = vpack.c.b16 %v1335, %v1328
    %v1819 = vpack.c.b16 %v1343, %v1336
    %v1820 = vpack.c.b16 %v1344, %v1337
    %v1821 = vpack.c.b16 %v1345, %v1338
    %v1822 = vpack.c.b16 %v1346, %v1339
    %v1823 = vpack.c.b16 %v1347, %v1340
    %v1824 = vpack.c.b16 %v1348, %v1341
    %v1825 = vpack.c.b16 %v1349, %v1342
    %v1826 = vpack.c.b16 %v1357, %v1350
    %v1827 = vpack.c.b16 %v1358, %v1351
    %v1828 = vpack.c.b16 %v1359, %v1352
    %v1829 = vpack.c.b16 %v1360, %v1353
    %v1830 = vpack.c.b16 %v1361, %v1354
    %v1831 = vpack.c.b16 %v1362, %v1355
    %v1832 = vpack.c.b16 %v1363, %v1356
    %v1833 = vpack.c.b16 %v1371, %v1364
    %v1834 = vpack.c.b16 %v1372, %v1365
    %v1835 = vpack.c.b16 %v1373, %v1366
    %v1836 = vpack.c.b16 %v1374, %v1367
    %v1837 = vpack.c.b16 %v1375, %v1368
    %v1838 = vpack.c.b16 %v1376, %v1369
    %v1839 = vpack.c.b16 %v1377, %v1370
    %v1840 = vpack.c.b16 %v1385, %v1378
    %v1841 = vpack.c.b16 %v1386, %v1379
    %v1842 = vpack.c.b16 %v1387, %v1380
    %v1843 = vpack.c.b16 %v1388, %v1381
    %v1844 = vpack.c.b16 %v1389, %v1382
    %v1845 = vpack.c.b16 %v1390, %v1383
    %v1846 = vpack.c.b16 %v1391, %v1384
    %v1847 = vpack.c.b16 %v1399, %v1392
    %v1848 = vpack.c.b16 %v1400, %v1393
    %v1849 = vpack.c.b16 %v1401, %v1394
    %v1850 = vpack.c.b16 %v1402, %v1395
    %v1851 = vpack.c.b16 %v1403, %v1396
    %v1852 = vpack.c.b16 %v1404, %v1397
    %v1853 = vpack.c.b16 %v1405, %v1398
    %v1854 = vpack.c.b16 %v1413, %v1406
    %v1855 = vpack.c.b16 %v1414, %v1407
    %v1856 = vpack.c.b16 %v1415, %v1408
    %v1857 = vpack.c.b16 %v1416, %v1409
    %v1858 = vpack.c.b16 %v1417, %v1410
    %v1859 = vpack.c.b16 %v1418, %v1411
    %v1860 = vpack.c.b16 %v1419, %v1412
    %v1861 = vpack.c.b16 %v1427, %v1420
    %v1862 = vpack.c.b16 %v1428, %v1421
    %v1863 = vpack.c.b16 %v1429, %v1422
    %v1864 = vpack.c.b16 %v1430, %v1423
    %v1865 = vpack.c.b16 %v1431, %v1424
    %v1866 = vpack.c.b16 %v1432, %v1425
    %v1867 = vpack.c.b16 %v1433, %v1426
    %v1868 = vpack.c.b16 %v1441, %v1434
    %v1869 = vpack.c.b16 %v1442, %v1435
    %v1870 = vpack.c.b16 %v1443, %v1436
    %v1871 = vpack.c.b16 %v1444, %v1437
    %v1872 = vpack.c.b16 %v1445, %v1438
    %v1873 = vpack.c.b16 %v1446, %v1439
    %v1874 = vpack.c.b16 %v1447, %v1440
    %v1875 = vpack.c.b16 %v1455, %v1448
    %v1876 = vpack.c.b16 %v1456, %v1449
    %v1877 = vpack.c.b16 %v1457, %v1450
    %v1878 = vpack.c.b16 %v1458, %v1451
    %v1879 = vpack.c.b16 %v1459, %v1452
    %v1880 = vpack.c.b16 %v1460, %v1453
    %v1881 = vpack.c.b16 %v1461, %v1454
    %v1882 = vpack.c.b16 %v1469, %v1462
    %v1883 = vpack.c.b16 %v1470, %v1463
    %v1884 = vpack.c.b16 %v1471, %v1464
    %v1885 = vpack.c.b16 %v1472, %v1465
    %v1886 = vpack.c.b16 %v1473, %v1466
    %v1887 = vpack.c.b16 %v1474, %v1467
    %v1888 = vpack.c.b16 %v1475, %v1468
    %v1889 = vpack.c.b16 %v1483, %v1476
    %v1890 = vpack.c.b16 %v1484, %v1477
    %v1891 = vpack.c.b16 %v1485, %v1478
    %v1892 = vpack.c.b16 %v1486, %v1479
    %v1893 = vpack.c.b16 %v1487, %v1480
    %v1894 = vpack.c.b16 %v1488, %v1481
    %v1895 = vpack.c.b16 %v1489, %v1482
    %v1896 = vpack.c.b16 %v1497, %v1490
    %v1897 = vpack.c.b16 %v1498, %v1491
    %v1898 = vpack.c.b16 %v1499, %v1492
    %v1899 = vpack.c.b16 %v1500, %v1493
    %v1900 = vpack.c.b16 %v1501, %v1494
    %v1901 = vpack.c.b16 %v1502, %v1495
    %v1902 = vpack.c.b16 %v1503, %v1496
    %v1903 = vpack.c.b16 %v1511, %v1504
    %v1904 = vpack.c.b16 %v1512, %v1505
    %v1905 = vpack.c.b16 %v1513, %v1506
    %v1906 = vpack.c.b16 %v1514, %v1507
    %v1907 = vpack.c.b16 %v1515, %v1508
    %v1908 = vpack.c.b16 %v1516, %v1509
    %v1909 = vpack.c.b16 %v1517, %v1510
    %v1910 = vpack.c.b16 %v1525, %v1518
    %v1911 = vpack.c.b16 %v1526, %v1519
    %v1912 = vpack.c.b16 %v1527, %v1520
    %v1913 = vpack.c.b16 %v1528, %v1521
    %v1914 = vpack.c.b16 %v1529, %v1522
    %v1915 = vpack.c.b16 %v1530, %v1523
    %v1916 = vpack.c.b16 %v1531, %v1524
    %v1917 = vpack.c.b16 %v1539, %v1532
    %v1918 = vpack.c.b16 %v1540, %v1533
    %v1919 = vpack.c.b16 %v1541, %v1534
    %v1920 = vpack.c.b16 %v1542, %v1535
    %v1921 = vpack.c.b16 %v1543, %v1536
    %v1922 = vpack.c.b16 %v1544, %v1537
    %v1923 = vpack.c.b16 %v1545, %v1538
    %v1924 = vpack.c.b16 %v1553, %v1546
    %v1925 = vpack.c.b16 %v1554, %v1547
    %v1926 = vpack.c.b16 %v1555, %v1548
    %v1927 = vpack.c.b16 %v1556, %v1549
    %v1928 = vpack.c.b16 %v1557, %v1550
    %v1929 = vpack.c.b16 %v1558, %v1551
    %v1930 = vpack.c.b16 %v1559, %v1552
    %v1931 = vpack.c.b16 %v1567, %v1560
    %v1932 = vpack.c.b16 %v1568, %v1561
    %v1933 = vpack.c.b16 %v1569, %v1562
    %v1934 = vpack.c.b16 %v1570, %v1563
    %v1935 = vpack.c.b16 %v1571, %v1564
    %v1936 = vpack.c.b16 %v1572, %v1565
    %v1937 = vpack.c.b16 %v1573, %v1566
    %v1938 = vpack.c.b16 %v1581, %v1574
    %v1939 = vpack.c.b16 %v1582, %v1575
    %v1940 = vpack.c.b16 %v1583, %v1576
    %v1941 = vpack.c.b16 %v1584, %v1577
    %v1942 = vpack.c.b16 %v1585, %v1578
    %v1943 = vpack.c.b16 %v1586, %v1579
    %v1944 = vpack.c.b16 %v1587, %v1580
    %v1945 = vpack.c.b16 %v1595, %v1588
    %v1946 = vpack.c.b16 %v1596, %v1589
    %v1947 = vpack.c.b16 %v1597, %v1590
    %v1948 = vpack.c.b16 %v1598, %v1591
    %v1949 = vpack.c.b16 %v1599, %v1592
    %v1950 = vpack.c.b16 %v1600, %v1593
    %v1951 = vpack.c.b16 %v1601, %v1594
    %v1952 = vpack.c.b16 %v1609, %v1602
    %v1953 = vpack.c.b16 %v1610, %v1603
    %v1954 = vpack.c.b16 %v1611, %v1604
    %v1955 = vpack.c.b16 %v1612, %v1605
    %v1956 = vpack.c.b16 %v1613, %v1606
    %v1957 = vpack.c.b16 %v1614, %v1607
    %v1958 = vpack.c.b16 %v1615, %v1608
    %vm2302 = vcmask 130048
    %v2304 = vsel %vm2302, %v530, 0
    %2306 = vmatprep.subr.bf16.mxu0 %v1617
    %2307 = vmatpush1.bf16.msra.mxu0 %v1616
    %2308 = vmatprep.subr.bf16.mxu0 %v1624
    %2309 = vmatpush1.bf16.msra.mxu0 %v1623
    %2310 = vmatprep.subr.bf16.mxu0 %v1631
    %2311 = vmatpush1.bf16.msra.mxu0 %v1630
    %2312 = vmatprep.subr.bf16.mxu0 %v1638
    %2313 = vmatpush1.bf16.msra.mxu0 %v1637
    %2314 = vmatprep.subr.bf16.mxu0 %v1645
    %2315 = vmatpush1.bf16.msra.mxu0 %v1644
    %2316 = vmatprep.subr.bf16.mxu0 %v1652
    %2317 = vmatpush1.bf16.msra.mxu0 %v1651
    %2318 = vmatprep.subr.bf16.mxu0 %v1659
    %2319 = vmatpush1.bf16.msra.mxu0 %v1658
    %2320 = vmatprep.subr.bf16.mxu0 %v1666
    %2321 = vmatpush1.bf16.msra.mxu0 %v1665
    %2322 = vmatprep.subr.bf16.mxu0 %v1673
    %2323 = vmatpush1.bf16.msra.mxu0 %v1672
    %2324 = vmatprep.subr.bf16.mxu0 %v1680
    %2325 = vmatpush1.bf16.msra.mxu0 %v1679
    %2326 = vmatprep.subr.bf16.mxu0 %v1687
    %2327 = vmatpush1.bf16.msra.mxu0 %v1686
    %2328 = vmatprep.subr.bf16.mxu0 %v1694
    %2329 = vmatpush1.bf16.msra.mxu0 %v1693
    %2330 = vmatprep.subr.bf16.mxu0 %v1701
    %2331 = vmatpush1.bf16.msra.mxu0 %v1700
    %2332 = vmatprep.subr.bf16.mxu0 %v1708
    %2333 = vmatpush1.bf16.msra.mxu0 %v1707
    %2334 = vmatprep.subr.bf16.mxu0 %v1715
    %2335 = vmatpush1.bf16.msra.mxu0 %v1714
    %2336 = vmatprep.subr.bf16.mxu0 %v1722
    %2337 = vmatpush1.bf16.msra.mxu0 %v1721
    %2338 = vmatprep.mubr.bf16.mxu0 %v521
    %2339 = vmatmul.mubr.bf16.gmra.mrb[0].mxu0 %v507
    %v2340 = vpop.f32.mrb[0].mxu0
    %v2341 = vadd.f32 %v451, %v2340
    %v2342 = vpop.f32.mrb[0].mxu0
    %v2343 = vadd.f32 %v455, %v2342
    %v2344 = vpop.f32.mrb[0].mxu0
    %v2345 = vpop.f32.mrb[0].mxu0
    %2346 = vdwg.mxu0
    %2347 = vmatprep.subr.bf16.mxu0 %v1729
    %2348 = vmatpush1.bf16.msra.mxu0 %v1728
    %2349 = vmatprep.subr.bf16.mxu0 %v1736
    %2350 = vmatpush1.bf16.msra.mxu0 %v1735
    %2351 = vmatprep.subr.bf16.mxu0 %v1743
    %2352 = vmatpush1.bf16.msra.mxu0 %v1742
    %2353 = vmatprep.subr.bf16.mxu0 %v1750
    %2354 = vmatpush1.bf16.msra.mxu0 %v1749
    %2355 = vmatprep.subr.bf16.mxu0 %v1757
    %2356 = vmatpush1.bf16.msra.mxu0 %v1756
    %2357 = vmatprep.subr.bf16.mxu0 %v1764
    %2358 = vmatpush1.bf16.msra.mxu0 %v1763
    %2359 = vmatprep.subr.bf16.mxu0 %v1771
    %2360 = vmatpush1.bf16.msra.mxu0 %v1770
    %2361 = vmatprep.subr.bf16.mxu0 %v1778
    %2362 = vmatpush1.bf16.msra.mxu0 %v1777
    %2363 = vmatprep.subr.bf16.mxu0 %v1785
    %2364 = vmatpush1.bf16.msra.mxu0 %v1784
    %2365 = vmatprep.subr.bf16.mxu0 %v1792
    %2366 = vmatpush1.bf16.msra.mxu0 %v1791
    %2367 = vmatprep.subr.bf16.mxu0 %v1799
    %2368 = vmatpush1.bf16.msra.mxu0 %v1798
    %2369 = vmatprep.subr.bf16.mxu0 %v1806
    %2370 = vmatpush1.bf16.msra.mxu0 %v1805
    %2371 = vmatprep.subr.bf16.mxu0 %v1813
    %2372 = vmatpush1.bf16.msra.mxu0 %v1812
    %2373 = vmatprep.subr.bf16.mxu0 %v1820
    %2374 = vmatpush1.bf16.msra.mxu0 %v1819
    %2375 = vmatprep.subr.bf16.mxu0 %v1827
    %2376 = vmatpush1.bf16.msra.mxu0 %v1826
    %2377 = vmatprep.subr.bf16.mxu0 %v1834
    %2378 = vmatpush1.bf16.msra.mxu0 %v1833
    %2379 = vmatprep.mubr.bf16.mxu0 %v531
    %2380 = vmatmul.mubr.bf16.gmra.mrb[0].mxu0 %v529
    %v2381 = vpop.f32.mrb[0].mxu0
    %v2382 = vadd.f32 %v2341, %v2381
    %v2383 = vpop.f32.mrb[0].mxu0
    %v2384 = vadd.f32 %v2343, %v2383
    %v2385 = vpop.f32.mrb[0].mxu0
    %v2386 = vpop.f32.mrb[0].mxu0
    %2387 = vdwg.mxu0
    %2388 = vmatprep.subr.bf16.mxu0 %v1841
    %2389 = vmatpush1.bf16.msra.mxu0 %v1840
    %2390 = vmatprep.subr.bf16.mxu0 %v1848
    %2391 = vmatpush1.bf16.msra.mxu0 %v1847
    %2392 = vmatprep.subr.bf16.mxu0 %v1855
    %2393 = vmatpush1.bf16.msra.mxu0 %v1854
    %2394 = vmatprep.subr.bf16.mxu0 %v1862
    %2395 = vmatpush1.bf16.msra.mxu0 %v1861
    %2396 = vmatprep.subr.bf16.mxu0 %v1869
    %2397 = vmatpush1.bf16.msra.mxu0 %v1868
    %2398 = vmatprep.subr.bf16.mxu0 %v1876
    %2399 = vmatpush1.bf16.msra.mxu0 %v1875
    %2400 = vmatprep.subr.bf16.mxu0 %v1883
    %2401 = vmatpush1.bf16.msra.mxu0 %v1882
    %2402 = vmatprep.subr.bf16.mxu0 %v1890
    %2403 = vmatpush1.bf16.msra.mxu0 %v1889
    %2404 = vmatprep.subr.bf16.mxu0 %v1897
    %2405 = vmatpush1.bf16.msra.mxu0 %v1896
    %2406 = vmatprep.subr.bf16.mxu0 %v1904
    %2407 = vmatpush1.bf16.msra.mxu0 %v1903
    %2408 = vmatprep.subr.bf16.mxu0 %v1911
    %2409 = vmatpush1.bf16.msra.mxu0 %v1910
    %2410 = vmatprep.subr.bf16.mxu0 %v1918
    %2411 = vmatpush1.bf16.msra.mxu0 %v1917
    %2412 = vmatprep.subr.bf16.mxu0 %v1925
    %2413 = vmatpush1.bf16.msra.mxu0 %v1924
    %2414 = vmatprep.subr.bf16.mxu0 %v1932
    %2415 = vmatpush1.bf16.msra.mxu0 %v1931
    %2416 = vmatprep.subr.bf16.mxu0 %v1939
    %2417 = vmatpush1.bf16.msra.mxu0 %v1938
    %2418 = vmatprep.subr.bf16.mxu0 %v1946
    %2419 = vmatpush1.bf16.msra.mxu0 %v1945
    %2420 = vmatprep.mubr.bf16.mxu0 %v528
    %2421 = vmatmul.mubr.bf16.gmra.mrb[0].mxu0 %v514
    %v2422 = vpop.f32.mrb[0].mxu0
    %v2423 = vadd.f32 %v2382, %v2422
    %v2424 = vpop.f32.mrb[0].mxu0
    %v2425 = vadd.f32 %v2384, %v2424
    %v2426 = vpop.f32.mrb[0].mxu0
    %v2427 = vpop.f32.mrb[0].mxu0
    %2428 = vdwg.mxu0
    %2429 = vmatprep.subr.bf16.mxu0 %v1953
    %2430 = vmatpush1.bf16.msra.mxu0 %v1952
    %2431 = vmatprep.subr.bf16.mxu0 0
    %2432 = vmatpush1.bf16.msra.mxu0 0
    %2433 = vmatprep.subr.bf16.mxu0 0
    %2434 = vmatpush1.bf16.msra.mxu0 0
    %2435 = vmatprep.subr.bf16.mxu0 0
    %2436 = vmatpush1.bf16.msra.mxu0 0
    %2437 = vmatprep.subr.bf16.mxu0 0
    %2438 = vmatpush1.bf16.msra.mxu0 0
    %2439 = vmatprep.subr.bf16.mxu0 0
    %2440 = vmatpush1.bf16.msra.mxu0 0
    %2441 = vmatprep.subr.bf16.mxu0 0
    %2442 = vmatpush1.bf16.msra.mxu0 0
    %2443 = vmatprep.subr.bf16.mxu0 0
    %2444 = vmatpush1.bf16.msra.mxu0 0
    %2445 = vmatprep.subr.bf16.mxu0 0
    %2446 = vmatpush1.bf16.msra.mxu0 0
    %2447 = vmatprep.subr.bf16.mxu0 0
    %2448 = vmatpush1.bf16.msra.mxu0 0
    %2449 = vmatprep.subr.bf16.mxu0 0
    %2450 = vmatpush1.bf16.msra.mxu0 0
    %2451 = vmatprep.subr.bf16.mxu0 0
    %2452 = vmatpush1.bf16.msra.mxu0 0
    %2453 = vmatprep.subr.bf16.mxu0 0
    %2454 = vmatpush1.bf16.msra.mxu0 0
    %2455 = vmatprep.subr.bf16.mxu0 0
    %2456 = vmatpush1.bf16.msra.mxu0 0
    %2457 = vmatprep.subr.bf16.mxu0 0
    %2458 = vmatpush1.bf16.msra.mxu0 0
    %2459 = vmatprep.subr.bf16.mxu0 0
    %2460 = vmatpush1.bf16.msra.mxu0 0
    %2461 = vmatprep.mubr.bf16.mxu0 0
    %2462 = vmatmul.mubr.bf16.gmra.mrb[0].mxu0 %v2304
    %v2463 = vpop.f32.mrb[0].mxu0
    %v2464 = vadd.f32 %v2423, %v2463
    %v2465 = vpop.f32.mrb[0].mxu0
    %v2466 = vadd.f32 %v2425, %v2465
    %v2467 = vpop.f32.mrb[0].mxu0
    %v2468 = vpop.f32.mrb[0].mxu0
    %2469 = vdwg.mxu0
    %2470 = vmatprep.subr.bf16.mxu0 %v1619
    %2471 = vmatpush1.bf16.msra.mxu0 %v1618
    %2472 = vmatprep.subr.bf16.mxu0 %v1626
    %2473 = vmatpush1.bf16.msra.mxu0 %v1625
    %2474 = vmatprep.subr.bf16.mxu0 %v1633
    %2475 = vmatpush1.bf16.msra.mxu0 %v1632
    %2476 = vmatprep.subr.bf16.mxu0 %v1640
    %2477 = vmatpush1.bf16.msra.mxu0 %v1639
    %2478 = vmatprep.subr.bf16.mxu0 %v1647
    %2479 = vmatpush1.bf16.msra.mxu0 %v1646
    %2480 = vmatprep.subr.bf16.mxu0 %v1654
    %2481 = vmatpush1.bf16.msra.mxu0 %v1653
    %2482 = vmatprep.subr.bf16.mxu0 %v1661
    %2483 = vmatpush1.bf16.msra.mxu0 %v1660
    %2484 = vmatprep.subr.bf16.mxu0 %v1668
    %2485 = vmatpush1.bf16.msra.mxu0 %v1667
    %2486 = vmatprep.subr.bf16.mxu0 %v1675
    %2487 = vmatpush1.bf16.msra.mxu0 %v1674
    %2488 = vmatprep.subr.bf16.mxu0 %v1682
    %2489 = vmatpush1.bf16.msra.mxu0 %v1681
    %2490 = vmatprep.subr.bf16.mxu0 %v1689
    %2491 = vmatpush1.bf16.msra.mxu0 %v1688
    %2492 = vmatprep.subr.bf16.mxu0 %v1696
    %2493 = vmatpush1.bf16.msra.mxu0 %v1695
    %2494 = vmatprep.subr.bf16.mxu0 %v1703
    %2495 = vmatpush1.bf16.msra.mxu0 %v1702
    %2496 = vmatprep.subr.bf16.mxu0 %v1710
    %2497 = vmatpush1.bf16.msra.mxu0 %v1709
    %2498 = vmatprep.subr.bf16.mxu0 %v1717
    %2499 = vmatpush1.bf16.msra.mxu0 %v1716
    %2500 = vmatprep.subr.bf16.mxu0 %v1724
    %2501 = vmatpush1.bf16.msra.mxu0 %v1723
    %2502 = vmatprep.mubr.bf16.mxu0 %v521
    %2503 = vmatmul.mubr.bf16.gmra.mrb[0].mxu0 %v507
    %v2504 = vpop.f32.mrb[0].mxu0
    %v2505 = vadd.f32 %v459, %v2504
    %v2506 = vpop.f32.mrb[0].mxu0
    %v2507 = vadd.f32 %v463, %v2506
    %v2508 = vpop.f32.mrb[0].mxu0
    %v2509 = vpop.f32.mrb[0].mxu0
    %2510 = vdwg.mxu0
    %2511 = vmatprep.subr.bf16.mxu0 %v1731
    %2512 = vmatpush1.bf16.msra.mxu0 %v1730
    %2513 = vmatprep.subr.bf16.mxu0 %v1738
    %2514 = vmatpush1.bf16.msra.mxu0 %v1737
    %2515 = vmatprep.subr.bf16.mxu0 %v1745
    %2516 = vmatpush1.bf16.msra.mxu0 %v1744
    %2517 = vmatprep.subr.bf16.mxu0 %v1752
    %2518 = vmatpush1.bf16.msra.mxu0 %v1751
    %2519 = vmatprep.subr.bf16.mxu0 %v1759
    %2520 = vmatpush1.bf16.msra.mxu0 %v1758
    %2521 = vmatprep.subr.bf16.mxu0 %v1766
    %2522 = vmatpush1.bf16.msra.mxu0 %v1765
    %2523 = vmatprep.subr.bf16.mxu0 %v1773
    %2524 = vmatpush1.bf16.msra.mxu0 %v1772
    %2525 = vmatprep.subr.bf16.mxu0 %v1780
    %2526 = vmatpush1.bf16.msra.mxu0 %v1779
    %2527 = vmatprep.subr.bf16.mxu0 %v1787
    %2528 = vmatpush1.bf16.msra.mxu0 %v1786
    %2529 = vmatprep.subr.bf16.mxu0 %v1794
    %2530 = vmatpush1.bf16.msra.mxu0 %v1793
    %2531 = vmatprep.subr.bf16.mxu0 %v1801
    %2532 = vmatpush1.bf16.msra.mxu0 %v1800
    %2533 = vmatprep.subr.bf16.mxu0 %v1808
    %2534 = vmatpush1.bf16.msra.mxu0 %v1807
    %2535 = vmatprep.subr.bf16.mxu0 %v1815
    %2536 = vmatpush1.bf16.msra.mxu0 %v1814
    %2537 = vmatprep.subr.bf16.mxu0 %v1822
    %2538 = vmatpush1.bf16.msra.mxu0 %v1821
    %2539 = vmatprep.subr.bf16.mxu0 %v1829
    %2540 = vmatpush1.bf16.msra.mxu0 %v1828
    %2541 = vmatprep.subr.bf16.mxu0 %v1836
    %2542 = vmatpush1.bf16.msra.mxu0 %v1835
    %2543 = vmatprep.mubr.bf16.mxu0 %v531
    %2544 = vmatmul.mubr.bf16.gmra.mrb[0].mxu0 %v529
    %v2545 = vpop.f32.mrb[0].mxu0
    %v2546 = vadd.f32 %v2505, %v2545
    %v2547 = vpop.f32.mrb[0].mxu0
    %v2548 = vadd.f32 %v2507, %v2547
    %v2549 = vpop.f32.mrb[0].mxu0
    %v2550 = vpop.f32.mrb[0].mxu0
    %2551 = vdwg.mxu0
    %2552 = vmatprep.subr.bf16.mxu0 %v1843
    %2553 = vmatpush1.bf16.msra.mxu0 %v1842
    %2554 = vmatprep.subr.bf16.mxu0 %v1850
    %2555 = vmatpush1.bf16.msra.mxu0 %v1849
    %2556 = vmatprep.subr.bf16.mxu0 %v1857
    %2557 = vmatpush1.bf16.msra.mxu0 %v1856
    %2558 = vmatprep.subr.bf16.mxu0 %v1864
    %2559 = vmatpush1.bf16.msra.mxu0 %v1863
    %2560 = vmatprep.subr.bf16.mxu0 %v1871
    %2561 = vmatpush1.bf16.msra.mxu0 %v1870
    %2562 = vmatprep.subr.bf16.mxu0 %v1878
    %2563 = vmatpush1.bf16.msra.mxu0 %v1877
    %2564 = vmatprep.subr.bf16.mxu0 %v1885
    %2565 = vmatpush1.bf16.msra.mxu0 %v1884
    %2566 = vmatprep.subr.bf16.mxu0 %v1892
    %2567 = vmatpush1.bf16.msra.mxu0 %v1891
    %2568 = vmatprep.subr.bf16.mxu0 %v1899
    %2569 = vmatpush1.bf16.msra.mxu0 %v1898
    %2570 = vmatprep.subr.bf16.mxu0 %v1906
    %2571 = vmatpush1.bf16.msra.mxu0 %v1905
    %2572 = vmatprep.subr.bf16.mxu0 %v1913
    %2573 = vmatpush1.bf16.msra.mxu0 %v1912
    %2574 = vmatprep.subr.bf16.mxu0 %v1920
    %2575 = vmatpush1.bf16.msra.mxu0 %v1919
    %2576 = vmatprep.subr.bf16.mxu0 %v1927
    %2577 = vmatpush1.bf16.msra.mxu0 %v1926
    %2578 = vmatprep.subr.bf16.mxu0 %v1934
    %2579 = vmatpush1.bf16.msra.mxu0 %v1933
    %2580 = vmatprep.subr.bf16.mxu0 %v1941
    %2581 = vmatpush1.bf16.msra.mxu0 %v1940
    %2582 = vmatprep.subr.bf16.mxu0 %v1948
    %2583 = vmatpush1.bf16.msra.mxu0 %v1947
    %2584 = vmatprep.mubr.bf16.mxu0 %v528
    %2585 = vmatmul.mubr.bf16.gmra.mrb[0].mxu0 %v514
    %v2586 = vpop.f32.mrb[0].mxu0
    %v2587 = vadd.f32 %v2546, %v2586
    %v2588 = vpop.f32.mrb[0].mxu0
    %v2589 = vadd.f32 %v2548, %v2588
    %v2590 = vpop.f32.mrb[0].mxu0
    %v2591 = vpop.f32.mrb[0].mxu0
    %2592 = vdwg.mxu0
    %2593 = vmatprep.subr.bf16.mxu0 %v1955
    %2594 = vmatpush1.bf16.msra.mxu0 %v1954
    %2595 = vmatprep.subr.bf16.mxu0 0
    %2596 = vmatpush1.bf16.msra.mxu0 0
    %2597 = vmatprep.subr.bf16.mxu0 0
    %2598 = vmatpush1.bf16.msra.mxu0 0
    %2599 = vmatprep.subr.bf16.mxu0 0
    %2600 = vmatpush1.bf16.msra.mxu0 0
    %2601 = vmatprep.subr.bf16.mxu0 0
    %2602 = vmatpush1.bf16.msra.mxu0 0
    %2603 = vmatprep.subr.bf16.mxu0 0
    %2604 = vmatpush1.bf16.msra.mxu0 0
    %2605 = vmatprep.subr.bf16.mxu0 0
    %2606 = vmatpush1.bf16.msra.mxu0 0
    %2607 = vmatprep.subr.bf16.mxu0 0
    %2608 = vmatpush1.bf16.msra.mxu0 0
    %2609 = vmatprep.subr.bf16.mxu0 0
    %2610 = vmatpush1.bf16.msra.mxu0 0
    %2611 = vmatprep.subr.bf16.mxu0 0
    %2612 = vmatpush1.bf16.msra.mxu0 0
    %2613 = vmatprep.subr.bf16.mxu0 0
    %2614 = vmatpush1.bf16.msra.mxu0 0
    %2615 = vmatprep.subr.bf16.mxu0 0
    %2616 = vmatpush1.bf16.msra.mxu0 0
    %2617 = vmatprep.subr.bf16.mxu0 0
    %2618 = vmatpush1.bf16.msra.mxu0 0
    %2619 = vmatprep.subr.bf16.mxu0 0
    %2620 = vmatpush1.bf16.msra.mxu0 0
    %2621 = vmatprep.subr.bf16.mxu0 0
    %2622 = vmatpush1.bf16.msra.mxu0 0
    %2623 = vmatprep.subr.bf16.mxu0 0
    %2624 = vmatpush1.bf16.msra.mxu0 0
    %2625 = vmatprep.mubr.bf16.mxu0 0
    %2626 = vmatmul.mubr.bf16.gmra.mrb[0].mxu0 %v2304
    %v2627 = vpop.f32.mrb[0].mxu0
    %v2628 = vadd.f32 %v2587, %v2627
    %v2629 = vpop.f32.mrb[0].mxu0
    %v2630 = vadd.f32 %v2589, %v2629
    %v2631 = vpop.f32.mrb[0].mxu0
    %v2632 = vpop.f32.mrb[0].mxu0
    %2633 = vdwg.mxu0
    %2634 = vmatprep.subr.bf16.mxu0 %v1621
    %2635 = vmatpush1.bf16.msra.mxu0 %v1620
    %2636 = vmatprep.subr.bf16.mxu0 %v1628
    %2637 = vmatpush1.bf16.msra.mxu0 %v1627
    %2638 = vmatprep.subr.bf16.mxu0 %v1635
    %2639 = vmatpush1.bf16.msra.mxu0 %v1634
    %2640 = vmatprep.subr.bf16.mxu0 %v1642
    %2641 = vmatpush1.bf16.msra.mxu0 %v1641
    %2642 = vmatprep.subr.bf16.mxu0 %v1649
    %2643 = vmatpush1.bf16.msra.mxu0 %v1648
    %2644 = vmatprep.subr.bf16.mxu0 %v1656
    %2645 = vmatpush1.bf16.msra.mxu0 %v1655
    %2646 = vmatprep.subr.bf16.mxu0 %v1663
    %2647 = vmatpush1.bf16.msra.mxu0 %v1662
    %2648 = vmatprep.subr.bf16.mxu0 %v1670
    %2649 = vmatpush1.bf16.msra.mxu0 %v1669
    %2650 = vmatprep.subr.bf16.mxu0 %v1677
    %2651 = vmatpush1.bf16.msra.mxu0 %v1676
    %2652 = vmatprep.subr.bf16.mxu0 %v1684
    %2653 = vmatpush1.bf16.msra.mxu0 %v1683
    %2654 = vmatprep.subr.bf16.mxu0 %v1691
    %2655 = vmatpush1.bf16.msra.mxu0 %v1690
    %2656 = vmatprep.subr.bf16.mxu0 %v1698
    %2657 = vmatpush1.bf16.msra.mxu0 %v1697
    %2658 = vmatprep.subr.bf16.mxu0 %v1705
    %2659 = vmatpush1.bf16.msra.mxu0 %v1704
    %2660 = vmatprep.subr.bf16.mxu0 %v1712
    %2661 = vmatpush1.bf16.msra.mxu0 %v1711
    %2662 = vmatprep.subr.bf16.mxu0 %v1719
    %2663 = vmatpush1.bf16.msra.mxu0 %v1718
    %2664 = vmatprep.subr.bf16.mxu0 %v1726
    %2665 = vmatpush1.bf16.msra.mxu0 %v1725
    %2666 = vmatprep.mubr.bf16.mxu0 %v521
    %2667 = vmatmul.mubr.bf16.gmra.mrb[0].mxu0 %v507
    %v2668 = vpop.f32.mrb[0].mxu0
    %v2669 = vadd.f32 %v467, %v2668
    %v2670 = vpop.f32.mrb[0].mxu0
    %v2671 = vadd.f32 %v471, %v2670
    %v2672 = vpop.f32.mrb[0].mxu0
    %v2673 = vpop.f32.mrb[0].mxu0
    %2674 = vdwg.mxu0
    %2675 = vmatprep.subr.bf16.mxu0 %v1733
    %2676 = vmatpush1.bf16.msra.mxu0 %v1732
    %2677 = vmatprep.subr.bf16.mxu0 %v1740
    %2678 = vmatpush1.bf16.msra.mxu0 %v1739
    %2679 = vmatprep.subr.bf16.mxu0 %v1747
    %2680 = vmatpush1.bf16.msra.mxu0 %v1746
    %2681 = vmatprep.subr.bf16.mxu0 %v1754
    %2682 = vmatpush1.bf16.msra.mxu0 %v1753
    %2683 = vmatprep.subr.bf16.mxu0 %v1761
    %2684 = vmatpush1.bf16.msra.mxu0 %v1760
    %2685 = vmatprep.subr.bf16.mxu0 %v1768
    %2686 = vmatpush1.bf16.msra.mxu0 %v1767
    %2687 = vmatprep.subr.bf16.mxu0 %v1775
    %2688 = vmatpush1.bf16.msra.mxu0 %v1774
    %2689 = vmatprep.subr.bf16.mxu0 %v1782
    %2690 = vmatpush1.bf16.msra.mxu0 %v1781
    %2691 = vmatprep.subr.bf16.mxu0 %v1789
    %2692 = vmatpush1.bf16.msra.mxu0 %v1788
    %2693 = vmatprep.subr.bf16.mxu0 %v1796
    %2694 = vmatpush1.bf16.msra.mxu0 %v1795
    %2695 = vmatprep.subr.bf16.mxu0 %v1803
    %2696 = vmatpush1.bf16.msra.mxu0 %v1802
    %2697 = vmatprep.subr.bf16.mxu0 %v1810
    %2698 = vmatpush1.bf16.msra.mxu0 %v1809
    %2699 = vmatprep.subr.bf16.mxu0 %v1817
    %2700 = vmatpush1.bf16.msra.mxu0 %v1816
    %2701 = vmatprep.subr.bf16.mxu0 %v1824
    %2702 = vmatpush1.bf16.msra.mxu0 %v1823
    %2703 = vmatprep.subr.bf16.mxu0 %v1831
    %2704 = vmatpush1.bf16.msra.mxu0 %v1830
    %2705 = vmatprep.subr.bf16.mxu0 %v1838
    %2706 = vmatpush1.bf16.msra.mxu0 %v1837
    %2707 = vmatprep.mubr.bf16.mxu0 %v531
    %2708 = vmatmul.mubr.bf16.gmra.mrb[0].mxu0 %v529
    %v2709 = vpop.f32.mrb[0].mxu0
    %v2710 = vadd.f32 %v2669, %v2709
    %v2711 = vpop.f32.mrb[0].mxu0
    %v2712 = vadd.f32 %v2671, %v2711
    %v2713 = vpop.f32.mrb[0].mxu0
    %v2714 = vpop.f32.mrb[0].mxu0
    %2715 = vdwg.mxu0
    %2716 = vmatprep.subr.bf16.mxu0 %v1845
    %2717 = vmatpush1.bf16.msra.mxu0 %v1844
    %2718 = vmatprep.subr.bf16.mxu0 %v1852
    %2719 = vmatpush1.bf16.msra.mxu0 %v1851
    %2720 = vmatprep.subr.bf16.mxu0 %v1859
    %2721 = vmatpush1.bf16.msra.mxu0 %v1858
    %2722 = vmatprep.subr.bf16.mxu0 %v1866
    %2723 = vmatpush1.bf16.msra.mxu0 %v1865
    %2724 = vmatprep.subr.bf16.mxu0 %v1873
    %2725 = vmatpush1.bf16.msra.mxu0 %v1872
    %2726 = vmatprep.subr.bf16.mxu0 %v1880
    %2727 = vmatpush1.bf16.msra.mxu0 %v1879
    %2728 = vmatprep.subr.bf16.mxu0 %v1887
    %2729 = vmatpush1.bf16.msra.mxu0 %v1886
    %2730 = vmatprep.subr.bf16.mxu0 %v1894
    %2731 = vmatpush1.bf16.msra.mxu0 %v1893
    %2732 = vmatprep.subr.bf16.mxu0 %v1901
    %2733 = vmatpush1.bf16.msra.mxu0 %v1900
    %2734 = vmatprep.subr.bf16.mxu0 %v1908
    %2735 = vmatpush1.bf16.msra.mxu0 %v1907
    %2736 = vmatprep.subr.bf16.mxu0 %v1915
    %2737 = vmatpush1.bf16.msra.mxu0 %v1914
    %2738 = vmatprep.subr.bf16.mxu0 %v1922
    %2739 = vmatpush1.bf16.msra.mxu0 %v1921
    %2740 = vmatprep.subr.bf16.mxu0 %v1929
    %2741 = vmatpush1.bf16.msra.mxu0 %v1928
    %2742 = vmatprep.subr.bf16.mxu0 %v1936
    %2743 = vmatpush1.bf16.msra.mxu0 %v1935
    %2744 = vmatprep.subr.bf16.mxu0 %v1943
    %2745 = vmatpush1.bf16.msra.mxu0 %v1942
    %2746 = vmatprep.subr.bf16.mxu0 %v1950
    %2747 = vmatpush1.bf16.msra.mxu0 %v1949
    %2748 = vmatprep.mubr.bf16.mxu0 %v528
    %2749 = vmatmul.mubr.bf16.gmra.mrb[0].mxu0 %v514
    %v2750 = vpop.f32.mrb[0].mxu0
    %v2751 = vadd.f32 %v2710, %v2750
    %v2752 = vpop.f32.mrb[0].mxu0
    %v2753 = vadd.f32 %v2712, %v2752
    %v2754 = vpop.f32.mrb[0].mxu0
    %v2755 = vpop.f32.mrb[0].mxu0
    %2756 = vdwg.mxu0
    %2757 = vmatprep.subr.bf16.mxu0 %v1957
    %2758 = vmatpush1.bf16.msra.mxu0 %v1956
    %2759 = vmatprep.subr.bf16.mxu0 0
    %2760 = vmatpush1.bf16.msra.mxu0 0
    %2761 = vmatprep.subr.bf16.mxu0 0
    %2762 = vmatpush1.bf16.msra.mxu0 0
    %2763 = vmatprep.subr.bf16.mxu0 0
    %2764 = vmatpush1.bf16.msra.mxu0 0
    %2765 = vmatprep.subr.bf16.mxu0 0
    %2766 = vmatpush1.bf16.msra.mxu0 0
    %2767 = vmatprep.subr.bf16.mxu0 0
    %2768 = vmatpush1.bf16.msra.mxu0 0
    %2769 = vmatprep.subr.bf16.mxu0 0
    %2770 = vmatpush1.bf16.msra.mxu0 0
    %2771 = vmatprep.subr.bf16.mxu0 0
    %2772 = vmatpush1.bf16.msra.mxu0 0
    %2773 = vmatprep.subr.bf16.mxu0 0
    %2774 = vmatpush1.bf16.msra.mxu0 0
    %2775 = vmatprep.subr.bf16.mxu0 0
    %2776 = vmatpush1.bf16.msra.mxu0 0
    %2777 = vmatprep.subr.bf16.mxu0 0
    %2778 = vmatpush1.bf16.msra.mxu0 0
    %2779 = vmatprep.subr.bf16.mxu0 0
    %2780 = vmatpush1.bf16.msra.mxu0 0
    %2781 = vmatprep.subr.bf16.mxu0 0
    %2782 = vmatpush1.bf16.msra.mxu0 0
    %2783 = vmatprep.subr.bf16.mxu0 0
    %2784 = vmatpush1.bf16.msra.mxu0 0
    %2785 = vmatprep.subr.bf16.mxu0 0
    %2786 = vmatpush1.bf16.msra.mxu0 0
    %2787 = vmatprep.subr.bf16.mxu0 0
    %2788 = vmatpush1.bf16.msra.mxu0 0
    %2789 = vmatprep.mubr.bf16.mxu0 0
    %2790 = vmatmul.mubr.bf16.gmra.mrb[0].mxu0 %v2304
    %v2791 = vpop.f32.mrb[0].mxu0
    %v2792 = vadd.f32 %v2751, %v2791
    %v2793 = vpop.f32.mrb[0].mxu0
    %v2794 = vadd.f32 %v2753, %v2793
    %v2795 = vpop.f32.mrb[0].mxu0
    %v2796 = vpop.f32.mrb[0].mxu0
    %2797 = vdwg.mxu0
    %2798 = vmatprep.subr.bf16.mxu0 0
    %2799 = vmatpush1.bf16.msra.mxu0 %v1622
    %2800 = vmatprep.subr.bf16.mxu0 0
    %2801 = vmatpush1.bf16.msra.mxu0 %v1629
    %2802 = vmatprep.subr.bf16.mxu0 0
    %2803 = vmatpush1.bf16.msra.mxu0 %v1636
    %2804 = vmatprep.subr.bf16.mxu0 0
    %2805 = vmatpush1.bf16.msra.mxu0 %v1643
    %2806 = vmatprep.subr.bf16.mxu0 0
    %2807 = vmatpush1.bf16.msra.mxu0 %v1650
    %2808 = vmatprep.subr.bf16.mxu0 0
    %2809 = vmatpush1.bf16.msra.mxu0 %v1657
    %2810 = vmatprep.subr.bf16.mxu0 0
    %2811 = vmatpush1.bf16.msra.mxu0 %v1664
    %2812 = vmatprep.subr.bf16.mxu0 0
    %2813 = vmatpush1.bf16.msra.mxu0 %v1671
    %2814 = vmatprep.subr.bf16.mxu0 0
    %2815 = vmatpush1.bf16.msra.mxu0 %v1678
    %2816 = vmatprep.subr.bf16.mxu0 0
    %2817 = vmatpush1.bf16.msra.mxu0 %v1685
    %2818 = vmatprep.subr.bf16.mxu0 0
    %2819 = vmatpush1.bf16.msra.mxu0 %v1692
    %2820 = vmatprep.subr.bf16.mxu0 0
    %2821 = vmatpush1.bf16.msra.mxu0 %v1699
    %2822 = vmatprep.subr.bf16.mxu0 0
    %2823 = vmatpush1.bf16.msra.mxu0 %v1706
    %2824 = vmatprep.subr.bf16.mxu0 0
    %2825 = vmatpush1.bf16.msra.mxu0 %v1713
    %2826 = vmatprep.subr.bf16.mxu0 0
    %2827 = vmatpush1.bf16.msra.mxu0 %v1720
    %2828 = vmatprep.subr.bf16.mxu0 0
    %2829 = vmatpush1.bf16.msra.mxu0 %v1727
    %2830 = vmatprep.mubr.bf16.mxu0 %v521
    %2831 = vmatmul.mubr.bf16.gmra.mrb[0].mxu0 %v507
    %v2832 = vpop.f32.mrb[0].mxu0
    %v2833 = vadd.f32 %v475, %v2832
    %v2834 = vpop.f32.mrb[0].mxu0
    %v2835 = vpop.f32.mrb[0].mxu0
    %v2836 = vpop.f32.mrb[0].mxu0
    %2837 = vdwg.mxu0
    %2838 = vmatprep.subr.bf16.mxu0 0
    %2839 = vmatpush1.bf16.msra.mxu0 %v1734
    %2840 = vmatprep.subr.bf16.mxu0 0
    %2841 = vmatpush1.bf16.msra.mxu0 %v1741
    %2842 = vmatprep.subr.bf16.mxu0 0
    %2843 = vmatpush1.bf16.msra.mxu0 %v1748
    %2844 = vmatprep.subr.bf16.mxu0 0
    %2845 = vmatpush1.bf16.msra.mxu0 %v1755
    %2846 = vmatprep.subr.bf16.mxu0 0
    %2847 = vmatpush1.bf16.msra.mxu0 %v1762
    %2848 = vmatprep.subr.bf16.mxu0 0
    %2849 = vmatpush1.bf16.msra.mxu0 %v1769
    %2850 = vmatprep.subr.bf16.mxu0 0
    %2851 = vmatpush1.bf16.msra.mxu0 %v1776
    %2852 = vmatprep.subr.bf16.mxu0 0
    %2853 = vmatpush1.bf16.msra.mxu0 %v1783
    %2854 = vmatprep.subr.bf16.mxu0 0
    %2855 = vmatpush1.bf16.msra.mxu0 %v1790
    %2856 = vmatprep.subr.bf16.mxu0 0
    %2857 = vmatpush1.bf16.msra.mxu0 %v1797
    %2858 = vmatprep.subr.bf16.mxu0 0
    %2859 = vmatpush1.bf16.msra.mxu0 %v1804
    %2860 = vmatprep.subr.bf16.mxu0 0
    %2861 = vmatpush1.bf16.msra.mxu0 %v1811
    %2862 = vmatprep.subr.bf16.mxu0 0
    %2863 = vmatpush1.bf16.msra.mxu0 %v1818
    %2864 = vmatprep.subr.bf16.mxu0 0
    %2865 = vmatpush1.bf16.msra.mxu0 %v1825
    %2866 = vmatprep.subr.bf16.mxu0 0
    %2867 = vmatpush1.bf16.msra.mxu0 %v1832
    %2868 = vmatprep.subr.bf16.mxu0 0
    %2869 = vmatpush1.bf16.msra.mxu0 %v1839
    %2870 = vmatprep.mubr.bf16.mxu0 %v531
    %2871 = vmatmul.mubr.bf16.gmra.mrb[0].mxu0 %v529
    %v2872 = vpop.f32.mrb[0].mxu0
    %v2873 = vadd.f32 %v2833, %v2872
    %v2874 = vpop.f32.mrb[0].mxu0
    %v2875 = vpop.f32.mrb[0].mxu0
    %v2876 = vpop.f32.mrb[0].mxu0
    %2877 = vdwg.mxu0
    %2878 = vmatprep.subr.bf16.mxu0 0
    %2879 = vmatpush1.bf16.msra.mxu0 %v1846
    %2880 = vmatprep.subr.bf16.mxu0 0
    %2881 = vmatpush1.bf16.msra.mxu0 %v1853
    %2882 = vmatprep.subr.bf16.mxu0 0
    %2883 = vmatpush1.bf16.msra.mxu0 %v1860
    %2884 = vmatprep.subr.bf16.mxu0 0
    %2885 = vmatpush1.bf16.msra.mxu0 %v1867
    %2886 = vmatprep.subr.bf16.mxu0 0
    %2887 = vmatpush1.bf16.msra.mxu0 %v1874
    %2888 = vmatprep.subr.bf16.mxu0 0
    %2889 = vmatpush1.bf16.msra.mxu0 %v1881
    %2890 = vmatprep.subr.bf16.mxu0 0
    %2891 = vmatpush1.bf16.msra.mxu0 %v1888
    %2892 = vmatprep.subr.bf16.mxu0 0
    %2893 = vmatpush1.bf16.msra.mxu0 %v1895
    %2894 = vmatprep.subr.bf16.mxu0 0
    %2895 = vmatpush1.bf16.msra.mxu0 %v1902
    %2896 = vmatprep.subr.bf16.mxu0 0
    %2897 = vmatpush1.bf16.msra.mxu0 %v1909
    %2898 = vmatprep.subr.bf16.mxu0 0
    %2899 = vmatpush1.bf16.msra.mxu0 %v1916
    %2900 = vmatprep.subr.bf16.mxu0 0
    %2901 = vmatpush1.bf16.msra.mxu0 %v1923
    %2902 = vmatprep.subr.bf16.mxu0 0
    %2903 = vmatpush1.bf16.msra.mxu0 %v1930
    %2904 = vmatprep.subr.bf16.mxu0 0
    %2905 = vmatpush1.bf16.msra.mxu0 %v1937
    %2906 = vmatprep.subr.bf16.mxu0 0
    %2907 = vmatpush1.bf16.msra.mxu0 %v1944
    %2908 = vmatprep.subr.bf16.mxu0 0
    %2909 = vmatpush1.bf16.msra.mxu0 %v1951
    %2910 = vmatprep.mubr.bf16.mxu0 %v528
    %2911 = vmatmul.mubr.bf16.gmra.mrb[0].mxu0 %v514
    %v2912 = vpop.f32.mrb[0].mxu0
    %v2913 = vadd.f32 %v2873, %v2912
    %v2914 = vpop.f32.mrb[0].mxu0
    %v2915 = vpop.f32.mrb[0].mxu0
    %v2916 = vpop.f32.mrb[0].mxu0
    %2917 = vdwg.mxu0
    %2918 = vmatprep.subr.bf16.mxu0 0
    %2919 = vmatpush1.bf16.msra.mxu0 %v1958
    %2920 = vmatprep.subr.bf16.mxu0 0
    %2921 = vmatpush1.bf16.msra.mxu0 0
    %2922 = vmatprep.subr.bf16.mxu0 0
    %2923 = vmatpush1.bf16.msra.mxu0 0
    %2924 = vmatprep.subr.bf16.mxu0 0
    %2925 = vmatpush1.bf16.msra.mxu0 0
    %2926 = vmatprep.subr.bf16.mxu0 0
    %2927 = vmatpush1.bf16.msra.mxu0 0
    %2928 = vmatprep.subr.bf16.mxu0 0
    %2929 = vmatpush1.bf16.msra.mxu0 0
    %2930 = vmatprep.subr.bf16.mxu0 0
    %2931 = vmatpush1.bf16.msra.mxu0 0
    %2932 = vmatprep.subr.bf16.mxu0 0
    %2933 = vmatpush1.bf16.msra.mxu0 0
    %2934 = vmatprep.subr.bf16.mxu0 0
    %2935 = vmatpush1.bf16.msra.mxu0 0
    %2936 = vmatprep.subr.bf16.mxu0 0
    %2937 = vmatpush1.bf16.msra.mxu0 0
    %2938 = vmatprep.subr.bf16.mxu0 0
    %2939 = vmatpush1.bf16.msra.mxu0 0
    %2940 = vmatprep.subr.bf16.mxu0 0
    %2941 = vmatpush1.bf16.msra.mxu0 0
    %2942 = vmatprep.subr.bf16.mxu0 0
    %2943 = vmatpush1.bf16.msra.mxu0 0
    %2944 = vmatprep.subr.bf16.mxu0 0
    %2945 = vmatpush1.bf16.msra.mxu0 0
    %2946 = vmatprep.subr.bf16.mxu0 0
    %2947 = vmatpush1.bf16.msra.mxu0 0
    %2948 = vmatprep.subr.bf16.mxu0 0
    %2949 = vmatpush1.bf16.msra.mxu0 0
    %2950 = vmatprep.mubr.bf16.mxu0 0
    %2951 = vmatmul.mubr.bf16.gmra.mrb[0].mxu0 %v2304
    %v2952 = vpop.f32.mrb[0].mxu0
    %v2953 = vadd.f32 %v2913, %v2952
    %v2954 = vpop.f32.mrb[0].mxu0
    %v2955 = vpop.f32.mrb[0].mxu0
    %v2956 = vpop.f32.mrb[0].mxu0
    %2957 = vdwg.mxu0
    %v2958 = vmax.f32 %v2464, 0.0
    %v2959 = vmax.f32 %v2466, 0.0
    %v2960 = vmax.f32 %v2628, 0.0
    %v2961 = vmax.f32 %v2630, 0.0
    %v2962 = vmax.f32 %v2792, 0.0
    %v2963 = vmax.f32 %v2794, 0.0
    %v2964 = vmax.f32 %v2953, 0.0
    %v2972 = vcombine.low %v2958, %v2959
    %v2973 = vcombine.low %v2960, %v2961
    %v2975 = vunpack.c.l.s4 1983009808
    %v2976 = vunpack.c.0.s8 %v2975
    %v2977 = vlaneseq
    %v2978 = vshrl.u32 %v2977, 7
    %v2979 = vsub.s32 %v2976, %v2978
    %v2980 = vrot.slane %v2972, %v2979
    %v2982 = vunpack.c.l.s4 1983009808
    %v2983 = vunpack.c.0.s8 %v2982
    %v2984 = vlaneseq
    %v2985 = vshrl.u32 %v2984, 7
    %v2986 = vsub.s32 %v2983, %v2985
    %v2987 = vrot.slane %v2973, %v2986
    %v2988 = vcombine.low %v2980, %v2987
    %v2989 = vcombine.low %v2962, %v2963
    %v2991 = vunpack.c.l.s4 1983009808
    %v2992 = vunpack.c.0.s8 %v2991
    %v2993 = vlaneseq
    %v2994 = vshrl.u32 %v2993, 7
    %v2995 = vsub.s32 %v2992, %v2994
    %v2996 = vrot.slane %v2989, %v2995
    %v2998 = vunpack.c.l.s4 1983009808
    %v2999 = vunpack.c.0.s8 %v2998
    %v3000 = vlaneseq
    %v3001 = vshrl.u32 %v3000, 7
    %v3002 = vsub.s32 %v2999, %v3001
    %v3003 = vrot.slane %v2964, %v3002
    %v3004 = vcombine.low %v2996, %v3003
    %3007 = vst [vmem:[#allocation8] sm:$0xff] %v2988
    %3008 = vst [vmem:[#allocation8 + $0x8] sm:$0x3f] %v3004
    // Predicated region
    $region26: #{tpu_custom_call.1} parent=1 // pred_check
      _
    $region27: #{tpu_custom_call.1} parent=1 // pred_check_branch
      %3010 = sbr.rel (0) target = $region29
    $region28: #{tpu_custom_call.1} parent=1 // pred_region
      %s3012 = ssub.s32 224, 224
      %3013 = vsyncadd [#allocation4], %s3012
      %s3015 = sshll.u32 [#allocation8], 4
      %s3016 = int_to_ptr.vmem [resolvable:$true] %s3015
      %3018 = dma.vmem_to_hbm [thread:$0]  %s3016, 224, %s3, [#allocation4]
    $region29: #{tpu_custom_call.1} parent=1 // pred_fallthru
      _
    // Predicated region
    $region30: #{tpu_custom_call.1} parent=1 // pred_check
      _
    $region31: #{tpu_custom_call.1} parent=1 // pred_check_branch
      %3020 = sbr.rel (0) target = $region33
    $region32: #{tpu_custom_call.1} parent=1 // pred_region
      %3021 = dma.done [#allocation4], 224
    $region33: #{tpu_custom_call.1} parent=1 // pred_fallthru
      _
    %3022 = vsyncpa [#allocation3], 1
    %3023 = vsyncpa [#allocation6], 1
    %3024 = vsyncpa [#allocation4], 1

</llo_original>
